<compile_context>
chip_gen: v5e
topology: v5e:2x2
jax: 0.10.0
libtpu: 0.0.40
codegen_flags: <defaults>
</compile_context>

<pallas_src>
import jax
import jax.numpy as jnp
from jax import lax
from jax.experimental import pallas as pl
from jax.experimental.pallas import tpu as pltpu

_LANE = 128


def _round_up(x, m):
    return ((x + m - 1) // m) * m


def _make_fused_while_kernel(target_idx, test, body_fn, max_iter, D, TB):
    """Kernel body for one (D, TB) tile of abstract states.

    Layout: features on the sublane axis (D rows), batch states on the lane
    axis (TB lanes).  `body_fn` is a pure JAX function (c, delta) -> (c, delta)
    operating on this transposed [D, TB] layout; it is traced into the kernel.
    All closed-over scalars are Python numbers (never jax arrays) so the kernel
    captures no constants.
    """
    test = float(test)
    target_idx = int(target_idx)
    tiny = 1e-38  # guards log(0) -> -inf on never-selected branches

    def kernel(u_ref, c_ref, d_ref, p_ref,
               res_c_ref, res_d_ref, res_p_ref, act_ref):
        # Hoisted loop invariant (JAX does not CSE broadcast/iota).
        row_is_target = (
            lax.broadcasted_iota(jnp.int32, (D, TB), 0) == target_idx)

        carry0 = (
            c_ref[...],                            # c      [D, TB]
            d_ref[...],                            # delta  [D, TB]
            p_ref[...],                            # p_log  [1, TB]
            jnp.ones((1, TB), jnp.bool_),          # active [1, TB]
            jnp.zeros((D, TB), jnp.float32),       # res_c  (non-target rows)
            jnp.zeros((D, TB), jnp.float32),       # res_d  (non-target rows)
            jnp.zeros((1, TB), jnp.float32),       # res_ct (target row of res_c)
            jnp.zeros((1, TB), jnp.float32),       # res_dt (target row of res_d)
            jnp.zeros((1, TB), jnp.float32),       # res_p
        )

        # TODO(synk): data-dependent early exit of the while loop is replaced by
        # a fixed MAXIMUM_ITERATION trip count (iterations after all lanes have
        # exited are all-false masks).
        def step(it, carry):
            c, d, p, active, res_c, res_d, res_ct, res_dt, res_p = carry

            tc = c[target_idx:target_idx + 1, :]         # [1, TB]
            td = d[target_idx:target_idx + 1, :]
            L = tc - td                                   # getLeft()
            R = tc + td                                   # getRight()

            # --- extract_branch_probability (non-'hybrid' score) ---
            # TODO(synk): constants.score_f == 'hybrid' variant not implemented.
            left_index = R <= test
            right_index = L > test
            denom = R - L
            inv = pl.reciprocal(jnp.where(denom == 0.0, 1.0, denom), approx=True)
            p_cross = (test - L) * inv
            p_left = jnp.where(left_index, 1.0,
                               jnp.where(right_index, 0.0, p_cross))
            p_right = 1.0 - p_left

            # --- sample_from_p: Bernoulli(p_left) via precomputed uniforms ---
            u = u_ref[it]                                 # lane-dense [1, TB]
            took_left = u < p_left
            go_left = jnp.logical_and(took_left, active)

            # --- interval clipping (only the target row changes) ---
            minRt = jnp.minimum(R, test)
            maxLt = jnp.maximum(L, test)
            bct = (L + minRt) * 0.5            # left-branch clipped center
            bdt = (minRt - L) * 0.5            # left-branch clipped delta
            oct_ = (maxLt + R) * 0.5           # right-branch clipped center
            odt = (R - maxLt) * 0.5            # right-branch clipped delta
            bp = p + jnp.log(jnp.maximum(p_left, tiny))
            op = p + jnp.log(jnp.maximum(p_right, tiny))

            # Freeze every currently-active lane into the result buffers:
            #  * lanes taking the right branch are final (concatenate_states),
            #  * lanes taking the left branch are tentative and get overwritten
            #    on their next iteration (or stay if MAXIMUM_ITERATION hits).
            # The target row is carried separately (res_ct/res_dt) and spliced
            # back once after the loop.
            res_c = jnp.where(active, c, res_c)
            res_d = jnp.where(active, d, res_d)
            res_ct = jnp.where(active, jnp.where(took_left, bct, oct_), res_ct)
            res_dt = jnp.where(active, jnp.where(took_left, bdt, odt), res_dt)
            res_p = jnp.where(active, jnp.where(took_left, bp, op), res_p)

            # states = self.body(body_states): splice the left clip into the
            # target row, run the traced body, mask the update back in only for
            # lanes that keep iterating.
            body_c = jnp.where(row_is_target, bct, c)
            body_d = jnp.where(row_is_target, bdt, d)
            nb_c, nb_d = body_fn(body_c, body_d)
            c = jnp.where(go_left, nb_c, c)
            d = jnp.where(go_left, nb_d, d)
            p = jnp.where(go_left, bp, p)
            active = go_left
            return (c, d, p, active, res_c, res_d, res_ct, res_dt, res_p)

        (_, _, _, active, res_c, res_d, res_ct, res_dt, res_p) = lax.fori_loop(
            0, max_iter, step, carry0, unroll=True)

        # TODO(synk): lanes still active after MAXIMUM_ITERATION are frozen to
        # their last pre-body left split (body_states); the PyTorch module's
        # trailing re-concatenation of orelse_states has no dense equivalent.
        res_c_ref[...] = jnp.where(row_is_target, res_ct, res_c)
        res_d_ref[...] = jnp.where(row_is_target, res_dt, res_d)
        res_p_ref[...] = res_p
        act_ref[...] = active.astype(jnp.float32)

    return kernel


class WhilePallas:
    """Pallas/JAX port of the DSE `While` module.

    The dynamic list-based state partitioning of the PyTorch version
    (trajectories_l / trajectories_r / idx_list / p_list) is replaced by
    fixed-size arrays with per-lane active masks; states that exit through the
    right (orelse) branch are frozen into the result buffers.  `body` must be a
    pure JAX function (c, delta) -> (c, delta) operating on the kernel's
    transposed [D, tile] layout (features on rows, states on lanes).
    External interface stays [B, D] / [B, 1]; transposition/padding is layout
    plumbing done in the jitted wrapper.
    """

    def __init__(self, target_idx, test, body, maximum_iteration=10,
                 row_tile=512):
        self.target_idx = int(target_idx)
        self.test = float(test)
        self.body = body
        self.maximum_iteration = int(maximum_iteration)
        self.row_tile = int(row_tile)
        self._cache = {}

    def _build(self, B, D):
        key = (B, D)
        if key in self._cache:
            return self._cache[key]

        f32 = jnp.float32
        max_iter = self.maximum_iteration

        # Tile the batch (lane) axis: multiple of 128, large tiles preferred
        # (per-grid-step overhead ~0.35us), but bounded so VMEM stays tiny on
        # every generation (v5e 16MiB scoped default .. v7x 64MiB/TC).
        b_pad128 = _round_up(max(B, 1), _LANE)
        TB = min(_round_up(self.row_tile, _LANE), b_pad128)
        B_pad = _round_up(b_pad128, TB)
        n_tiles = B_pad // TB

        kernel = _make_fused_while_kernel(
            self.target_idx, self.test, self.body, max_iter, D, TB)

        call = pl.pallas_call(
            kernel,
            grid=(n_tiles,),
            in_specs=[
                pl.BlockSpec((max_iter, 1, TB), lambda i: (0, 0, i)),  # uniforms
                pl.BlockSpec((D, TB), lambda i: (0, i)),               # c^T
                pl.BlockSpec((D, TB), lambda i: (0, i)),               # delta^T
                pl.BlockSpec((1, TB), lambda i: (0, i)),               # p_log^T
            ],
            out_specs=(
                pl.BlockSpec((D, TB), lambda i: (0, i)),               # res_c^T
                pl.BlockSpec((D, TB), lambda i: (0, i)),               # res_d^T
                pl.BlockSpec((1, TB), lambda i: (0, i)),               # res_p^T
                pl.BlockSpec((1, TB), lambda i: (0, i)),               # active
            ),
            out_shape=(
                jax.ShapeDtypeStruct((D, B_pad), f32),
                jax.ShapeDtypeStruct((D, B_pad), f32),
                jax.ShapeDtypeStruct((1, B_pad), f32),
                jax.ShapeDtypeStruct((1, B_pad), f32),
            ),
            compiler_params=pltpu.CompilerParams(
                dimension_semantics=("parallel",),
                vmem_limit_bytes=32 * 1024 * 1024,
            ),
        )

        @jax.jit
        def run(c, delta, p_log, seed):
            prng = jax.random.PRNGKey(seed)
            # One lane-dense uniform row per iteration: [max_iter, 1, B_pad].
            u = jax.random.uniform(prng, (max_iter, 1, B_pad), dtype=f32)
            pad = B_pad - B
            cT = jnp.pad(c.astype(f32).T, ((0, 0), (0, pad)))
            dT = jnp.pad(delta.astype(f32).T, ((0, 0), (0, pad)))
            pT = jnp.pad(p_log.astype(f32).T, ((0, 0), (0, pad)))
            rc, rd, rp, act = call(u, cT, dT, pT)
            res_c = rc[:, :B].T
            res_d = rd[:, :B].T
            res_p = rp[:, :B].T
            still_active = act[:, :B].T > 0.5
            return res_c, res_d, res_p, still_active

        self._cache[key] = run
        return run

    def __call__(self, c, delta, p_log, seed=0):
        B, D = c.shape
        run = self._build(B, D)
        return run(c, delta, p_log, jnp.uint32(seed))


if __name__ == "__main__":
    B, D = 8, 8
    target_idx = 0
    test = 3.0

    key = jax.random.PRNGKey(0)
    kc, kd = jax.random.split(key)
    c0 = jax.random.uniform(kc, (B, D), jnp.float32, minval=0.0, maxval=4.0)
    d0 = jax.random.uniform(kd, (B, D), jnp.float32, minval=0.0, maxval=0.5)
    p_log0 = jnp.zeros((B, 1), jnp.float32)

    def loop_body(c, d):
        # simple loop body: increment the loop variable (target row in the
        # kernel's transposed [D, tile] layout) by 1.0
        row = lax.broadcasted_iota(jnp.int32, c.shape, 0) == target_idx
        return jnp.where(row, c + 1.0, c), d

    while_mod = WhilePallas(target_idx, test, loop_body, maximum_iteration=10)
    res_c, res_d, res_p, still_active = while_mod(c0, d0, p_log0, seed=0)
    jax.block_until_ready((res_c, res_d, res_p, still_active))
    print("KERNEL_OK")
</pallas_src>

<mosaic_0001>
module attributes {stable_mosaic.version = 11 : i64} {
  func.func @kernel(%arg0: i32, %arg1: memref<10x1x128xf32, #tpu.memory_space<vmem>>, %arg2: memref<8x128xf32, #tpu.memory_space<vmem>>, %arg3: memref<8x128xf32, #tpu.memory_space<vmem>>, %arg4: memref<1x128xf32, #tpu.memory_space<vmem>>, %arg5: memref<8x128xf32, #tpu.memory_space<vmem>>, %arg6: memref<8x128xf32, #tpu.memory_space<vmem>>, %arg7: memref<1x128xf32, #tpu.memory_space<vmem>>, %arg8: memref<1x128xf32, #tpu.memory_space<vmem>>) attributes {dimension_semantics = [#tpu.dimension_semantics<parallel>], iteration_bounds = array<i64: 1>, scalar_prefetch = 0 : i64, scratch_operands = 0 : i64, tpu.core_type = #tpu.core_type<tc>, window_params = [{transform_indices = @transform_0, window_bounds = array<i64: 10, 1, 128>}, {transform_indices = @transform_1, window_bounds = array<i64: 8, 128>}, {transform_indices = @transform_2, window_bounds = array<i64: 8, 128>}, {transform_indices = @transform_3, window_bounds = array<i64: 1, 128>}, {transform_indices = @transform_4, window_bounds = array<i64: 8, 128>}, {transform_indices = @transform_5, window_bounds = array<i64: 8, 128>}, {transform_indices = @transform_6, window_bounds = array<i64: 1, 128>}, {transform_indices = @transform_7, window_bounds = array<i64: 1, 128>}]} {
    %0 = tpu.iota {dimensions = array<i32: 0>} : vector<8x128xi32>
    %c0_i32 = arith.constant 0 : i32
    %1 = vector.broadcast %c0_i32 : i32 to vector<8x128xi32>
    %2 = arith.cmpi eq, %0, %1 : vector<8x128xi32>
    %c0 = arith.constant 0 : index
    %c0_0 = arith.constant 0 : index
    %3 = vector.load %arg2[%c0, %c0_0] : memref<8x128xf32, #tpu.memory_space<vmem>>, vector<8x128xf32>
    %c0_1 = arith.constant 0 : index
    %c0_2 = arith.constant 0 : index
    %4 = vector.load %arg3[%c0_1, %c0_2] : memref<8x128xf32, #tpu.memory_space<vmem>>, vector<8x128xf32>
    %c0_3 = arith.constant 0 : index
    %c0_4 = arith.constant 0 : index
    %5 = vector.load %arg4[%c0_3, %c0_4] : memref<1x128xf32, #tpu.memory_space<vmem>>, vector<1x128xf32>
    %true = arith.constant true
    %6 = vector.broadcast %true : i1 to vector<1x128xi1>
    %cst = arith.constant 0.000000e+00 : f32
    %7 = vector.broadcast %cst : f32 to vector<8x128xf32>
    %cst_5 = arith.constant 0.000000e+00 : f32
    %8 = vector.broadcast %cst_5 : f32 to vector<8x128xf32>
    %cst_6 = arith.constant 0.000000e+00 : f32
    %9 = vector.broadcast %cst_6 : f32 to vector<1x128xf32>
    %cst_7 = arith.constant 0.000000e+00 : f32
    %10 = vector.broadcast %cst_7 : f32 to vector<1x128xf32>
    %cst_8 = arith.constant 0.000000e+00 : f32
    %11 = vector.broadcast %cst_8 : f32 to vector<1x128xf32>
    %c0_i32_9 = arith.constant 0 : i32
    %12 = vector.extract_strided_slice %3 {offsets = [0, 0], sizes = [1, 128], strides = [1, 1]} : vector<8x128xf32> to vector<1x128xf32>
    %13 = vector.extract_strided_slice %4 {offsets = [0, 0], sizes = [1, 128], strides = [1, 1]} : vector<8x128xf32> to vector<1x128xf32>
    %14 = arith.subf %12, %13 : vector<1x128xf32>
    %15 = arith.addf %12, %13 : vector<1x128xf32>
    %cst_10 = arith.constant 3.000000e+00 : f32
    %16 = vector.broadcast %cst_10 : f32 to vector<1x128xf32>
    %17 = arith.cmpf ole, %15, %16 : vector<1x128xf32>
    %cst_11 = arith.constant 3.000000e+00 : f32
    %18 = vector.broadcast %cst_11 : f32 to vector<1x128xf32>
    %19 = arith.cmpf ogt, %14, %18 : vector<1x128xf32>
    %20 = arith.subf %15, %14 : vector<1x128xf32>
    %cst_12 = arith.constant 0.000000e+00 : f32
    %21 = vector.broadcast %cst_12 : f32 to vector<1x128xf32>
    %22 = arith.cmpf oeq, %20, %21 : vector<1x128xf32>
    %cst_13 = arith.constant 1.000000e+00 : f32
    %23 = vector.broadcast %cst_13 : f32 to vector<1x128xf32>
    %24 = arith.select %22, %23, %20 : vector<1x128xi1>, vector<1x128xf32>
    %25 = tpu.reciprocal %24 {approx = true} : vector<1x128xf32> -> vector<1x128xf32>
    %cst_14 = arith.constant 3.000000e+00 : f32
    %26 = vector.broadcast %cst_14 : f32 to vector<1x128xf32>
    %27 = arith.subf %26, %14 : vector<1x128xf32>
    %28 = arith.mulf %27, %25 : vector<1x128xf32>
    %cst_15 = arith.constant 0.000000e+00 : f32
    %29 = vector.broadcast %cst_15 : f32 to vector<1x128xf32>
    %30 = arith.select %19, %29, %28 : vector<1x128xi1>, vector<1x128xf32>
    %cst_16 = arith.constant 1.000000e+00 : f32
    %31 = vector.broadcast %cst_16 : f32 to vector<1x128xf32>
    %32 = arith.select %17, %31, %30 : vector<1x128xi1>, vector<1x128xf32>
    %cst_17 = arith.constant 1.000000e+00 : f32
    %33 = vector.broadcast %cst_17 : f32 to vector<1x128xf32>
    %34 = arith.subf %33, %32 : vector<1x128xf32>
    %35 = arith.index_cast %c0_i32_9 : i32 to index
    %c0_18 = arith.constant 0 : index
    %c0_19 = arith.constant 0 : index
    %36 = vector.load %arg1[%35, %c0_18, %c0_19] : memref<10x1x128xf32, #tpu.memory_space<vmem>>, vector<1x1x128xf32>
    %37 = vector.shape_cast %36 : vector<1x1x128xf32> to vector<1x128xf32>
    %38 = arith.cmpf olt, %37, %32 : vector<1x128xf32>
    %39 = arith.andi %38, %6 : vector<1x128xi1>
    %cst_20 = arith.constant 3.000000e+00 : f32
    %40 = vector.broadcast %cst_20 : f32 to vector<1x128xf32>
    %41 = arith.minimumf %15, %40 : vector<1x128xf32>
    %cst_21 = arith.constant 3.000000e+00 : f32
    %42 = vector.broadcast %cst_21 : f32 to vector<1x128xf32>
    %43 = arith.maximumf %14, %42 : vector<1x128xf32>
    %44 = arith.addf %14, %41 : vector<1x128xf32>
    %cst_22 = arith.constant 5.000000e-01 : f32
    %45 = vector.broadcast %cst_22 : f32 to vector<1x128xf32>
    %46 = arith.mulf %44, %45 : vector<1x128xf32>
    %47 = arith.subf %41, %14 : vector<1x128xf32>
    %cst_23 = arith.constant 5.000000e-01 : f32
    %48 = vector.broadcast %cst_23 : f32 to vector<1x128xf32>
    %49 = arith.mulf %47, %48 : vector<1x128xf32>
    %50 = arith.addf %43, %15 : vector<1x128xf32>
    %cst_24 = arith.constant 5.000000e-01 : f32
    %51 = vector.broadcast %cst_24 : f32 to vector<1x128xf32>
    %52 = arith.mulf %50, %51 : vector<1x128xf32>
    %53 = arith.subf %15, %43 : vector<1x128xf32>
    %cst_25 = arith.constant 5.000000e-01 : f32
    %54 = vector.broadcast %cst_25 : f32 to vector<1x128xf32>
    %55 = arith.mulf %53, %54 : vector<1x128xf32>
    %cst_26 = arith.constant 9.99999935E-39 : f32
    %56 = vector.broadcast %cst_26 : f32 to vector<1x128xf32>
    %57 = arith.maximumf %32, %56 : vector<1x128xf32>
    %58 = math.log %57 : vector<1x128xf32>
    %59 = arith.addf %5, %58 : vector<1x128xf32>
    %cst_27 = arith.constant 9.99999935E-39 : f32
    %60 = vector.broadcast %cst_27 : f32 to vector<1x128xf32>
    %61 = arith.maximumf %34, %60 : vector<1x128xf32>
    %62 = math.log %61 : vector<1x128xf32>
    %63 = arith.addf %5, %62 : vector<1x128xf32>
    %64 = vector.shape_cast %6 : vector<1x128xi1> to vector<1x128xi1>
    %65 = vector.broadcast %64 : vector<1x128xi1> to vector<8x128xi1>
    %66 = arith.select %65, %3, %7 : vector<8x128xi1>, vector<8x128xf32>
    %67 = vector.shape_cast %6 : vector<1x128xi1> to vector<1x128xi1>
    %68 = vector.broadcast %67 : vector<1x128xi1> to vector<8x128xi1>
    %69 = arith.select %68, %4, %8 : vector<8x128xi1>, vector<8x128xf32>
    %70 = arith.select %38, %46, %52 : vector<1x128xi1>, vector<1x128xf32>
    %71 = arith.select %6, %70, %9 : vector<1x128xi1>, vector<1x128xf32>
    %72 = arith.select %38, %49, %55 : vector<1x128xi1>, vector<1x128xf32>
    %73 = arith.select %6, %72, %10 : vector<1x128xi1>, vector<1x128xf32>
    %74 = arith.select %38, %59, %63 : vector<1x128xi1>, vector<1x128xf32>
    %75 = arith.select %6, %74, %11 : vector<1x128xi1>, vector<1x128xf32>
    %76 = vector.shape_cast %46 : vector<1x128xf32> to vector<1x128xf32>
    %77 = vector.broadcast %76 : vector<1x128xf32> to vector<8x128xf32>
    %78 = arith.select %2, %77, %3 : vector<8x128xi1>, vector<8x128xf32>
    %79 = vector.shape_cast %49 : vector<1x128xf32> to vector<1x128xf32>
    %80 = vector.broadcast %79 : vector<1x128xf32> to vector<8x128xf32>
    %81 = arith.select %2, %80, %4 : vector<8x128xi1>, vector<8x128xf32>
    %82 = tpu.iota {dimensions = array<i32: 0>} : vector<8x128xi32>
    %c0_i32_28 = arith.constant 0 : i32
    %83 = vector.broadcast %c0_i32_28 : i32 to vector<8x128xi32>
    %84 = arith.cmpi eq, %82, %83 : vector<8x128xi32>
    %cst_29 = arith.constant 1.000000e+00 : f32
    %85 = vector.broadcast %cst_29 : f32 to vector<8x128xf32>
    %86 = arith.addf %78, %85 : vector<8x128xf32>
    %87 = arith.select %84, %86, %78 : vector<8x128xi1>, vector<8x128xf32>
    %88 = vector.shape_cast %39 : vector<1x128xi1> to vector<1x128xi1>
    %89 = vector.broadcast %88 : vector<1x128xi1> to vector<8x128xi1>
    %90 = arith.select %89, %87, %3 : vector<8x128xi1>, vector<8x128xf32>
    %91 = vector.shape_cast %39 : vector<1x128xi1> to vector<1x128xi1>
    %92 = vector.broadcast %91 : vector<1x128xi1> to vector<8x128xi1>
    %93 = arith.select %92, %81, %4 : vector<8x128xi1>, vector<8x128xf32>
    %94 = arith.select %39, %59, %5 : vector<1x128xi1>, vector<1x128xf32>
    %c1_i32 = arith.constant 1 : i32
    %95 = vector.extract_strided_slice %90 {offsets = [0, 0], sizes = [1, 128], strides = [1, 1]} : vector<8x128xf32> to vector<1x128xf32>
    %96 = vector.extract_strided_slice %93 {offsets = [0, 0], sizes = [1, 128], strides = [1, 1]} : vector<8x128xf32> to vector<1x128xf32>
    %97 = arith.subf %95, %96 : vector<1x128xf32>
    %98 = arith.addf %95, %96 : vector<1x128xf32>
    %cst_30 = arith.constant 3.000000e+00 : f32
    %99 = vector.broadcast %cst_30 : f32 to vector<1x128xf32>
    %100 = arith.cmpf ole, %98, %99 : vector<1x128xf32>
    %cst_31 = arith.constant 3.000000e+00 : f32
    %101 = vector.broadcast %cst_31 : f32 to vector<1x128xf32>
    %102 = arith.cmpf ogt, %97, %101 : vector<1x128xf32>
    %103 = arith.subf %98, %97 : vector<1x128xf32>
    %cst_32 = arith.constant 0.000000e+00 : f32
    %104 = vector.broadcast %cst_32 : f32 to vector<1x128xf32>
    %105 = arith.cmpf oeq, %103, %104 : vector<1x128xf32>
    %cst_33 = arith.constant 1.000000e+00 : f32
    %106 = vector.broadcast %cst_33 : f32 to vector<1x128xf32>
    %107 = arith.select %105, %106, %103 : vector<1x128xi1>, vector<1x128xf32>
    %108 = tpu.reciprocal %107 {approx = true} : vector<1x128xf32> -> vector<1x128xf32>
    %cst_34 = arith.constant 3.000000e+00 : f32
    %109 = vector.broadcast %cst_34 : f32 to vector<1x128xf32>
    %110 = arith.subf %109, %97 : vector<1x128xf32>
    %111 = arith.mulf %110, %108 : vector<1x128xf32>
    %cst_35 = arith.constant 0.000000e+00 : f32
    %112 = vector.broadcast %cst_35 : f32 to vector<1x128xf32>
    %113 = arith.select %102, %112, %111 : vector<1x128xi1>, vector<1x128xf32>
    %cst_36 = arith.constant 1.000000e+00 : f32
    %114 = vector.broadcast %cst_36 : f32 to vector<1x128xf32>
    %115 = arith.select %100, %114, %113 : vector<1x128xi1>, vector<1x128xf32>
    %cst_37 = arith.constant 1.000000e+00 : f32
    %116 = vector.broadcast %cst_37 : f32 to vector<1x128xf32>
    %117 = arith.subf %116, %115 : vector<1x128xf32>
    %118 = arith.index_cast %c1_i32 : i32 to index
    %c0_38 = arith.constant 0 : index
    %c0_39 = arith.constant 0 : index
    %119 = vector.load %arg1[%118, %c0_38, %c0_39] : memref<10x1x128xf32, #tpu.memory_space<vmem>>, vector<1x1x128xf32>
    %120 = vector.shape_cast %119 : vector<1x1x128xf32> to vector<1x128xf32>
    %121 = arith.cmpf olt, %120, %115 : vector<1x128xf32>
    %122 = arith.andi %121, %39 : vector<1x128xi1>
    %cst_40 = arith.constant 3.000000e+00 : f32
    %123 = vector.broadcast %cst_40 : f32 to vector<1x128xf32>
    %124 = arith.minimumf %98, %123 : vector<1x128xf32>
    %cst_41 = arith.constant 3.000000e+00 : f32
    %125 = vector.broadcast %cst_41 : f32 to vector<1x128xf32>
    %126 = arith.maximumf %97, %125 : vector<1x128xf32>
    %127 = arith.addf %97, %124 : vector<1x128xf32>
    %cst_42 = arith.constant 5.000000e-01 : f32
    %128 = vector.broadcast %cst_42 : f32 to vector<1x128xf32>
    %129 = arith.mulf %127, %128 : vector<1x128xf32>
    %130 = arith.subf %124, %97 : vector<1x128xf32>
    %cst_43 = arith.constant 5.000000e-01 : f32
    %131 = vector.broadcast %cst_43 : f32 to vector<1x128xf32>
    %132 = arith.mulf %130, %131 : vector<1x128xf32>
    %133 = arith.addf %126, %98 : vector<1x128xf32>
    %cst_44 = arith.constant 5.000000e-01 : f32
    %134 = vector.broadcast %cst_44 : f32 to vector<1x128xf32>
    %135 = arith.mulf %133, %134 : vector<1x128xf32>
    %136 = arith.subf %98, %126 : vector<1x128xf32>
    %cst_45 = arith.constant 5.000000e-01 : f32
    %137 = vector.broadcast %cst_45 : f32 to vector<1x128xf32>
    %138 = arith.mulf %136, %137 : vector<1x128xf32>
    %cst_46 = arith.constant 9.99999935E-39 : f32
    %139 = vector.broadcast %cst_46 : f32 to vector<1x128xf32>
    %140 = arith.maximumf %115, %139 : vector<1x128xf32>
    %141 = math.log %140 : vector<1x128xf32>
    %142 = arith.addf %94, %141 : vector<1x128xf32>
    %cst_47 = arith.constant 9.99999935E-39 : f32
    %143 = vector.broadcast %cst_47 : f32 to vector<1x128xf32>
    %144 = arith.maximumf %117, %143 : vector<1x128xf32>
    %145 = math.log %144 : vector<1x128xf32>
    %146 = arith.addf %94, %145 : vector<1x128xf32>
    %147 = vector.shape_cast %39 : vector<1x128xi1> to vector<1x128xi1>
    %148 = vector.broadcast %147 : vector<1x128xi1> to vector<8x128xi1>
    %149 = arith.select %148, %90, %66 : vector<8x128xi1>, vector<8x128xf32>
    %150 = vector.shape_cast %39 : vector<1x128xi1> to vector<1x128xi1>
    %151 = vector.broadcast %150 : vector<1x128xi1> to vector<8x128xi1>
    %152 = arith.select %151, %93, %69 : vector<8x128xi1>, vector<8x128xf32>
    %153 = arith.select %121, %129, %135 : vector<1x128xi1>, vector<1x128xf32>
    %154 = arith.select %39, %153, %71 : vector<1x128xi1>, vector<1x128xf32>
    %155 = arith.select %121, %132, %138 : vector<1x128xi1>, vector<1x128xf32>
    %156 = arith.select %39, %155, %73 : vector<1x128xi1>, vector<1x128xf32>
    %157 = arith.select %121, %142, %146 : vector<1x128xi1>, vector<1x128xf32>
    %158 = arith.select %39, %157, %75 : vector<1x128xi1>, vector<1x128xf32>
    %159 = vector.shape_cast %129 : vector<1x128xf32> to vector<1x128xf32>
    %160 = vector.broadcast %159 : vector<1x128xf32> to vector<8x128xf32>
    %161 = arith.select %2, %160, %90 : vector<8x128xi1>, vector<8x128xf32>
    %162 = vector.shape_cast %132 : vector<1x128xf32> to vector<1x128xf32>
    %163 = vector.broadcast %162 : vector<1x128xf32> to vector<8x128xf32>
    %164 = arith.select %2, %163, %93 : vector<8x128xi1>, vector<8x128xf32>
    %165 = tpu.iota {dimensions = array<i32: 0>} : vector<8x128xi32>
    %c0_i32_48 = arith.constant 0 : i32
    %166 = vector.broadcast %c0_i32_48 : i32 to vector<8x128xi32>
    %167 = arith.cmpi eq, %165, %166 : vector<8x128xi32>
    %cst_49 = arith.constant 1.000000e+00 : f32
    %168 = vector.broadcast %cst_49 : f32 to vector<8x128xf32>
    %169 = arith.addf %161, %168 : vector<8x128xf32>
    %170 = arith.select %167, %169, %161 : vector<8x128xi1>, vector<8x128xf32>
    %171 = vector.shape_cast %122 : vector<1x128xi1> to vector<1x128xi1>
    %172 = vector.broadcast %171 : vector<1x128xi1> to vector<8x128xi1>
    %173 = arith.select %172, %170, %90 : vector<8x128xi1>, vector<8x128xf32>
    %174 = vector.shape_cast %122 : vector<1x128xi1> to vector<1x128xi1>
    %175 = vector.broadcast %174 : vector<1x128xi1> to vector<8x128xi1>
    %176 = arith.select %175, %164, %93 : vector<8x128xi1>, vector<8x128xf32>
    %177 = arith.select %122, %142, %94 : vector<1x128xi1>, vector<1x128xf32>
    %c2_i32 = arith.constant 2 : i32
    %178 = vector.extract_strided_slice %173 {offsets = [0, 0], sizes = [1, 128], strides = [1, 1]} : vector<8x128xf32> to vector<1x128xf32>
    %179 = vector.extract_strided_slice %176 {offsets = [0, 0], sizes = [1, 128], strides = [1, 1]} : vector<8x128xf32> to vector<1x128xf32>
    %180 = arith.subf %178, %179 : vector<1x128xf32>
    %181 = arith.addf %178, %179 : vector<1x128xf32>
    %cst_50 = arith.constant 3.000000e+00 : f32
    %182 = vector.broadcast %cst_50 : f32 to vector<1x128xf32>
    %183 = arith.cmpf ole, %181, %182 : vector<1x128xf32>
    %cst_51 = arith.constant 3.000000e+00 : f32
    %184 = vector.broadcast %cst_51 : f32 to vector<1x128xf32>
    %185 = arith.cmpf ogt, %180, %184 : vector<1x128xf32>
    %186 = arith.subf %181, %180 : vector<1x128xf32>
    %cst_52 = arith.constant 0.000000e+00 : f32
    %187 = vector.broadcast %cst_52 : f32 to vector<1x128xf32>
    %188 = arith.cmpf oeq, %186, %187 : vector<1x128xf32>
    %cst_53 = arith.constant 1.000000e+00 : f32
    %189 = vector.broadcast %cst_53 : f32 to vector<1x128xf32>
    %190 = arith.select %188, %189, %186 : vector<1x128xi1>, vector<1x128xf32>
    %191 = tpu.reciprocal %190 {approx = true} : vector<1x128xf32> -> vector<1x128xf32>
    %cst_54 = arith.constant 3.000000e+00 : f32
    %192 = vector.broadcast %cst_54 : f32 to vector<1x128xf32>
    %193 = arith.subf %192, %180 : vector<1x128xf32>
    %194 = arith.mulf %193, %191 : vector<1x128xf32>
    %cst_55 = arith.constant 0.000000e+00 : f32
    %195 = vector.broadcast %cst_55 : f32 to vector<1x128xf32>
    %196 = arith.select %185, %195, %194 : vector<1x128xi1>, vector<1x128xf32>
    %cst_56 = arith.constant 1.000000e+00 : f32
    %197 = vector.broadcast %cst_56 : f32 to vector<1x128xf32>
    %198 = arith.select %183, %197, %196 : vector<1x128xi1>, vector<1x128xf32>
    %cst_57 = arith.constant 1.000000e+00 : f32
    %199 = vector.broadcast %cst_57 : f32 to vector<1x128xf32>
    %200 = arith.subf %199, %198 : vector<1x128xf32>
    %201 = arith.index_cast %c2_i32 : i32 to index
    %c0_58 = arith.constant 0 : index
    %c0_59 = arith.constant 0 : index
    %202 = vector.load %arg1[%201, %c0_58, %c0_59] : memref<10x1x128xf32, #tpu.memory_space<vmem>>, vector<1x1x128xf32>
    %203 = vector.shape_cast %202 : vector<1x1x128xf32> to vector<1x128xf32>
    %204 = arith.cmpf olt, %203, %198 : vector<1x128xf32>
    %205 = arith.andi %204, %122 : vector<1x128xi1>
    %cst_60 = arith.constant 3.000000e+00 : f32
    %206 = vector.broadcast %cst_60 : f32 to vector<1x128xf32>
    %207 = arith.minimumf %181, %206 : vector<1x128xf32>
    %cst_61 = arith.constant 3.000000e+00 : f32
    %208 = vector.broadcast %cst_61 : f32 to vector<1x128xf32>
    %209 = arith.maximumf %180, %208 : vector<1x128xf32>
    %210 = arith.addf %180, %207 : vector<1x128xf32>
    %cst_62 = arith.constant 5.000000e-01 : f32
    %211 = vector.broadcast %cst_62 : f32 to vector<1x128xf32>
    %212 = arith.mulf %210, %211 : vector<1x128xf32>
    %213 = arith.subf %207, %180 : vector<1x128xf32>
    %cst_63 = arith.constant 5.000000e-01 : f32
    %214 = vector.broadcast %cst_63 : f32 to vector<1x128xf32>
    %215 = arith.mulf %213, %214 : vector<1x128xf32>
    %216 = arith.addf %209, %181 : vector<1x128xf32>
    %cst_64 = arith.constant 5.000000e-01 : f32
    %217 = vector.broadcast %cst_64 : f32 to vector<1x128xf32>
    %218 = arith.mulf %216, %217 : vector<1x128xf32>
    %219 = arith.subf %181, %209 : vector<1x128xf32>
    %cst_65 = arith.constant 5.000000e-01 : f32
    %220 = vector.broadcast %cst_65 : f32 to vector<1x128xf32>
    %221 = arith.mulf %219, %220 : vector<1x128xf32>
    %cst_66 = arith.constant 9.99999935E-39 : f32
    %222 = vector.broadcast %cst_66 : f32 to vector<1x128xf32>
    %223 = arith.maximumf %198, %222 : vector<1x128xf32>
    %224 = math.log %223 : vector<1x128xf32>
    %225 = arith.addf %177, %224 : vector<1x128xf32>
    %cst_67 = arith.constant 9.99999935E-39 : f32
    %226 = vector.broadcast %cst_67 : f32 to vector<1x128xf32>
    %227 = arith.maximumf %200, %226 : vector<1x128xf32>
    %228 = math.log %227 : vector<1x128xf32>
    %229 = arith.addf %177, %228 : vector<1x128xf32>
    %230 = vector.shape_cast %122 : vector<1x128xi1> to vector<1x128xi1>
    %231 = vector.broadcast %230 : vector<1x128xi1> to vector<8x128xi1>
    %232 = arith.select %231, %173, %149 : vector<8x128xi1>, vector<8x128xf32>
    %233 = vector.shape_cast %122 : vector<1x128xi1> to vector<1x128xi1>
    %234 = vector.broadcast %233 : vector<1x128xi1> to vector<8x128xi1>
    %235 = arith.select %234, %176, %152 : vector<8x128xi1>, vector<8x128xf32>
    %236 = arith.select %204, %212, %218 : vector<1x128xi1>, vector<1x128xf32>
    %237 = arith.select %122, %236, %154 : vector<1x128xi1>, vector<1x128xf32>
    %238 = arith.select %204, %215, %221 : vector<1x128xi1>, vector<1x128xf32>
    %239 = arith.select %122, %238, %156 : vector<1x128xi1>, vector<1x128xf32>
    %240 = arith.select %204, %225, %229 : vector<1x128xi1>, vector<1x128xf32>
    %241 = arith.select %122, %240, %158 : vector<1x128xi1>, vector<1x128xf32>
    %242 = vector.shape_cast %212 : vector<1x128xf32> to vector<1x128xf32>
    %243 = vector.broadcast %242 : vector<1x128xf32> to vector<8x128xf32>
    %244 = arith.select %2, %243, %173 : vector<8x128xi1>, vector<8x128xf32>
    %245 = vector.shape_cast %215 : vector<1x128xf32> to vector<1x128xf32>
    %246 = vector.broadcast %245 : vector<1x128xf32> to vector<8x128xf32>
    %247 = arith.select %2, %246, %176 : vector<8x128xi1>, vector<8x128xf32>
    %248 = tpu.iota {dimensions = array<i32: 0>} : vector<8x128xi32>
    %c0_i32_68 = arith.constant 0 : i32
    %249 = vector.broadcast %c0_i32_68 : i32 to vector<8x128xi32>
    %250 = arith.cmpi eq, %248, %249 : vector<8x128xi32>
    %cst_69 = arith.constant 1.000000e+00 : f32
    %251 = vector.broadcast %cst_69 : f32 to vector<8x128xf32>
    %252 = arith.addf %244, %251 : vector<8x128xf32>
    %253 = arith.select %250, %252, %244 : vector<8x128xi1>, vector<8x128xf32>
    %254 = vector.shape_cast %205 : vector<1x128xi1> to vector<1x128xi1>
    %255 = vector.broadcast %254 : vector<1x128xi1> to vector<8x128xi1>
    %256 = arith.select %255, %253, %173 : vector<8x128xi1>, vector<8x128xf32>
    %257 = vector.shape_cast %205 : vector<1x128xi1> to vector<1x128xi1>
    %258 = vector.broadcast %257 : vector<1x128xi1> to vector<8x128xi1>
    %259 = arith.select %258, %247, %176 : vector<8x128xi1>, vector<8x128xf32>
    %260 = arith.select %205, %225, %177 : vector<1x128xi1>, vector<1x128xf32>
    %c3_i32 = arith.constant 3 : i32
    %261 = vector.extract_strided_slice %256 {offsets = [0, 0], sizes = [1, 128], strides = [1, 1]} : vector<8x128xf32> to vector<1x128xf32>
    %262 = vector.extract_strided_slice %259 {offsets = [0, 0], sizes = [1, 128], strides = [1, 1]} : vector<8x128xf32> to vector<1x128xf32>
    %263 = arith.subf %261, %262 : vector<1x128xf32>
    %264 = arith.addf %261, %262 : vector<1x128xf32>
    %cst_70 = arith.constant 3.000000e+00 : f32
    %265 = vector.broadcast %cst_70 : f32 to vector<1x128xf32>
    %266 = arith.cmpf ole, %264, %265 : vector<1x128xf32>
    %cst_71 = arith.constant 3.000000e+00 : f32
    %267 = vector.broadcast %cst_71 : f32 to vector<1x128xf32>
    %268 = arith.cmpf ogt, %263, %267 : vector<1x128xf32>
    %269 = arith.subf %264, %263 : vector<1x128xf32>
    %cst_72 = arith.constant 0.000000e+00 : f32
    %270 = vector.broadcast %cst_72 : f32 to vector<1x128xf32>
    %271 = arith.cmpf oeq, %269, %270 : vector<1x128xf32>
    %cst_73 = arith.constant 1.000000e+00 : f32
    %272 = vector.broadcast %cst_73 : f32 to vector<1x128xf32>
    %273 = arith.select %271, %272, %269 : vector<1x128xi1>, vector<1x128xf32>
    %274 = tpu.reciprocal %273 {approx = true} : vector<1x128xf32> -> vector<1x128xf32>
    %cst_74 = arith.constant 3.000000e+00 : f32
    %275 = vector.broadcast %cst_74 : f32 to vector<1x128xf32>
    %276 = arith.subf %275, %263 : vector<1x128xf32>
    %277 = arith.mulf %276, %274 : vector<1x128xf32>
    %cst_75 = arith.constant 0.000000e+00 : f32
    %278 = vector.broadcast %cst_75 : f32 to vector<1x128xf32>
    %279 = arith.select %268, %278, %277 : vector<1x128xi1>, vector<1x128xf32>
    %cst_76 = arith.constant 1.000000e+00 : f32
    %280 = vector.broadcast %cst_76 : f32 to vector<1x128xf32>
    %281 = arith.select %266, %280, %279 : vector<1x128xi1>, vector<1x128xf32>
    %cst_77 = arith.constant 1.000000e+00 : f32
    %282 = vector.broadcast %cst_77 : f32 to vector<1x128xf32>
    %283 = arith.subf %282, %281 : vector<1x128xf32>
    %284 = arith.index_cast %c3_i32 : i32 to index
    %c0_78 = arith.constant 0 : index
    %c0_79 = arith.constant 0 : index
    %285 = vector.load %arg1[%284, %c0_78, %c0_79] : memref<10x1x128xf32, #tpu.memory_space<vmem>>, vector<1x1x128xf32>
    %286 = vector.shape_cast %285 : vector<1x1x128xf32> to vector<1x128xf32>
    %287 = arith.cmpf olt, %286, %281 : vector<1x128xf32>
    %288 = arith.andi %287, %205 : vector<1x128xi1>
    %cst_80 = arith.constant 3.000000e+00 : f32
    %289 = vector.broadcast %cst_80 : f32 to vector<1x128xf32>
    %290 = arith.minimumf %264, %289 : vector<1x128xf32>
    %cst_81 = arith.constant 3.000000e+00 : f32
    %291 = vector.broadcast %cst_81 : f32 to vector<1x128xf32>
    %292 = arith.maximumf %263, %291 : vector<1x128xf32>
    %293 = arith.addf %263, %290 : vector<1x128xf32>
    %cst_82 = arith.constant 5.000000e-01 : f32
    %294 = vector.broadcast %cst_82 : f32 to vector<1x128xf32>
    %295 = arith.mulf %293, %294 : vector<1x128xf32>
    %296 = arith.subf %290, %263 : vector<1x128xf32>
    %cst_83 = arith.constant 5.000000e-01 : f32
    %297 = vector.broadcast %cst_83 : f32 to vector<1x128xf32>
    %298 = arith.mulf %296, %297 : vector<1x128xf32>
    %299 = arith.addf %292, %264 : vector<1x128xf32>
    %cst_84 = arith.constant 5.000000e-01 : f32
    %300 = vector.broadcast %cst_84 : f32 to vector<1x128xf32>
    %301 = arith.mulf %299, %300 : vector<1x128xf32>
    %302 = arith.subf %264, %292 : vector<1x128xf32>
    %cst_85 = arith.constant 5.000000e-01 : f32
    %303 = vector.broadcast %cst_85 : f32 to vector<1x128xf32>
    %304 = arith.mulf %302, %303 : vector<1x128xf32>
    %cst_86 = arith.constant 9.99999935E-39 : f32
    %305 = vector.broadcast %cst_86 : f32 to vector<1x128xf32>
    %306 = arith.maximumf %281, %305 : vector<1x128xf32>
    %307 = math.log %306 : vector<1x128xf32>
    %308 = arith.addf %260, %307 : vector<1x128xf32>
    %cst_87 = arith.constant 9.99999935E-39 : f32
    %309 = vector.broadcast %cst_87 : f32 to vector<1x128xf32>
    %310 = arith.maximumf %283, %309 : vector<1x128xf32>
    %311 = math.log %310 : vector<1x128xf32>
    %312 = arith.addf %260, %311 : vector<1x128xf32>
    %313 = vector.shape_cast %205 : vector<1x128xi1> to vector<1x128xi1>
    %314 = vector.broadcast %313 : vector<1x128xi1> to vector<8x128xi1>
    %315 = arith.select %314, %256, %232 : vector<8x128xi1>, vector<8x128xf32>
    %316 = vector.shape_cast %205 : vector<1x128xi1> to vector<1x128xi1>
    %317 = vector.broadcast %316 : vector<1x128xi1> to vector<8x128xi1>
    %318 = arith.select %317, %259, %235 : vector<8x128xi1>, vector<8x128xf32>
    %319 = arith.select %287, %295, %301 : vector<1x128xi1>, vector<1x128xf32>
    %320 = arith.select %205, %319, %237 : vector<1x128xi1>, vector<1x128xf32>
    %321 = arith.select %287, %298, %304 : vector<1x128xi1>, vector<1x128xf32>
    %322 = arith.select %205, %321, %239 : vector<1x128xi1>, vector<1x128xf32>
    %323 = arith.select %287, %308, %312 : vector<1x128xi1>, vector<1x128xf32>
    %324 = arith.select %205, %323, %241 : vector<1x128xi1>, vector<1x128xf32>
    %325 = vector.shape_cast %295 : vector<1x128xf32> to vector<1x128xf32>
    %326 = vector.broadcast %325 : vector<1x128xf32> to vector<8x128xf32>
    %327 = arith.select %2, %326, %256 : vector<8x128xi1>, vector<8x128xf32>
    %328 = vector.shape_cast %298 : vector<1x128xf32> to vector<1x128xf32>
    %329 = vector.broadcast %328 : vector<1x128xf32> to vector<8x128xf32>
    %330 = arith.select %2, %329, %259 : vector<8x128xi1>, vector<8x128xf32>
    %331 = tpu.iota {dimensions = array<i32: 0>} : vector<8x128xi32>
    %c0_i32_88 = arith.constant 0 : i32
    %332 = vector.broadcast %c0_i32_88 : i32 to vector<8x128xi32>
    %333 = arith.cmpi eq, %331, %332 : vector<8x128xi32>
    %cst_89 = arith.constant 1.000000e+00 : f32
    %334 = vector.broadcast %cst_89 : f32 to vector<8x128xf32>
    %335 = arith.addf %327, %334 : vector<8x128xf32>
    %336 = arith.select %333, %335, %327 : vector<8x128xi1>, vector<8x128xf32>
    %337 = vector.shape_cast %288 : vector<1x128xi1> to vector<1x128xi1>
    %338 = vector.broadcast %337 : vector<1x128xi1> to vector<8x128xi1>
    %339 = arith.select %338, %336, %256 : vector<8x128xi1>, vector<8x128xf32>
    %340 = vector.shape_cast %288 : vector<1x128xi1> to vector<1x128xi1>
    %341 = vector.broadcast %340 : vector<1x128xi1> to vector<8x128xi1>
    %342 = arith.select %341, %330, %259 : vector<8x128xi1>, vector<8x128xf32>
    %343 = arith.select %288, %308, %260 : vector<1x128xi1>, vector<1x128xf32>
    %c4_i32 = arith.constant 4 : i32
    %344 = vector.extract_strided_slice %339 {offsets = [0, 0], sizes = [1, 128], strides = [1, 1]} : vector<8x128xf32> to vector<1x128xf32>
    %345 = vector.extract_strided_slice %342 {offsets = [0, 0], sizes = [1, 128], strides = [1, 1]} : vector<8x128xf32> to vector<1x128xf32>
    %346 = arith.subf %344, %345 : vector<1x128xf32>
    %347 = arith.addf %344, %345 : vector<1x128xf32>
    %cst_90 = arith.constant 3.000000e+00 : f32
    %348 = vector.broadcast %cst_90 : f32 to vector<1x128xf32>
    %349 = arith.cmpf ole, %347, %348 : vector<1x128xf32>
    %cst_91 = arith.constant 3.000000e+00 : f32
    %350 = vector.broadcast %cst_91 : f32 to vector<1x128xf32>
    %351 = arith.cmpf ogt, %346, %350 : vector<1x128xf32>
    %352 = arith.subf %347, %346 : vector<1x128xf32>
    %cst_92 = arith.constant 0.000000e+00 : f32
    %353 = vector.broadcast %cst_92 : f32 to vector<1x128xf32>
    %354 = arith.cmpf oeq, %352, %353 : vector<1x128xf32>
    %cst_93 = arith.constant 1.000000e+00 : f32
    %355 = vector.broadcast %cst_93 : f32 to vector<1x128xf32>
    %356 = arith.select %354, %355, %352 : vector<1x128xi1>, vector<1x128xf32>
    %357 = tpu.reciprocal %356 {approx = true} : vector<1x128xf32> -> vector<1x128xf32>
    %cst_94 = arith.constant 3.000000e+00 : f32
    %358 = vector.broadcast %cst_94 : f32 to vector<1x128xf32>
    %359 = arith.subf %358, %346 : vector<1x128xf32>
    %360 = arith.mulf %359, %357 : vector<1x128xf32>
    %cst_95 = arith.constant 0.000000e+00 : f32
    %361 = vector.broadcast %cst_95 : f32 to vector<1x128xf32>
    %362 = arith.select %351, %361, %360 : vector<1x128xi1>, vector<1x128xf32>
    %cst_96 = arith.constant 1.000000e+00 : f32
    %363 = vector.broadcast %cst_96 : f32 to vector<1x128xf32>
    %364 = arith.select %349, %363, %362 : vector<1x128xi1>, vector<1x128xf32>
    %cst_97 = arith.constant 1.000000e+00 : f32
    %365 = vector.broadcast %cst_97 : f32 to vector<1x128xf32>
    %366 = arith.subf %365, %364 : vector<1x128xf32>
    %367 = arith.index_cast %c4_i32 : i32 to index
    %c0_98 = arith.constant 0 : index
    %c0_99 = arith.constant 0 : index
    %368 = vector.load %arg1[%367, %c0_98, %c0_99] : memref<10x1x128xf32, #tpu.memory_space<vmem>>, vector<1x1x128xf32>
    %369 = vector.shape_cast %368 : vector<1x1x128xf32> to vector<1x128xf32>
    %370 = arith.cmpf olt, %369, %364 : vector<1x128xf32>
    %371 = arith.andi %370, %288 : vector<1x128xi1>
    %cst_100 = arith.constant 3.000000e+00 : f32
    %372 = vector.broadcast %cst_100 : f32 to vector<1x128xf32>
    %373 = arith.minimumf %347, %372 : vector<1x128xf32>
    %cst_101 = arith.constant 3.000000e+00 : f32
    %374 = vector.broadcast %cst_101 : f32 to vector<1x128xf32>
    %375 = arith.maximumf %346, %374 : vector<1x128xf32>
    %376 = arith.addf %346, %373 : vector<1x128xf32>
    %cst_102 = arith.constant 5.000000e-01 : f32
    %377 = vector.broadcast %cst_102 : f32 to vector<1x128xf32>
    %378 = arith.mulf %376, %377 : vector<1x128xf32>
    %379 = arith.subf %373, %346 : vector<1x128xf32>
    %cst_103 = arith.constant 5.000000e-01 : f32
    %380 = vector.broadcast %cst_103 : f32 to vector<1x128xf32>
    %381 = arith.mulf %379, %380 : vector<1x128xf32>
    %382 = arith.addf %375, %347 : vector<1x128xf32>
    %cst_104 = arith.constant 5.000000e-01 : f32
    %383 = vector.broadcast %cst_104 : f32 to vector<1x128xf32>
    %384 = arith.mulf %382, %383 : vector<1x128xf32>
    %385 = arith.subf %347, %375 : vector<1x128xf32>
    %cst_105 = arith.constant 5.000000e-01 : f32
    %386 = vector.broadcast %cst_105 : f32 to vector<1x128xf32>
    %387 = arith.mulf %385, %386 : vector<1x128xf32>
    %cst_106 = arith.constant 9.99999935E-39 : f32
    %388 = vector.broadcast %cst_106 : f32 to vector<1x128xf32>
    %389 = arith.maximumf %364, %388 : vector<1x128xf32>
    %390 = math.log %389 : vector<1x128xf32>
    %391 = arith.addf %343, %390 : vector<1x128xf32>
    %cst_107 = arith.constant 9.99999935E-39 : f32
    %392 = vector.broadcast %cst_107 : f32 to vector<1x128xf32>
    %393 = arith.maximumf %366, %392 : vector<1x128xf32>
    %394 = math.log %393 : vector<1x128xf32>
    %395 = arith.addf %343, %394 : vector<1x128xf32>
    %396 = vector.shape_cast %288 : vector<1x128xi1> to vector<1x128xi1>
    %397 = vector.broadcast %396 : vector<1x128xi1> to vector<8x128xi1>
    %398 = arith.select %397, %339, %315 : vector<8x128xi1>, vector<8x128xf32>
    %399 = vector.shape_cast %288 : vector<1x128xi1> to vector<1x128xi1>
    %400 = vector.broadcast %399 : vector<1x128xi1> to vector<8x128xi1>
    %401 = arith.select %400, %342, %318 : vector<8x128xi1>, vector<8x128xf32>
    %402 = arith.select %370, %378, %384 : vector<1x128xi1>, vector<1x128xf32>
    %403 = arith.select %288, %402, %320 : vector<1x128xi1>, vector<1x128xf32>
    %404 = arith.select %370, %381, %387 : vector<1x128xi1>, vector<1x128xf32>
    %405 = arith.select %288, %404, %322 : vector<1x128xi1>, vector<1x128xf32>
    %406 = arith.select %370, %391, %395 : vector<1x128xi1>, vector<1x128xf32>
    %407 = arith.select %288, %406, %324 : vector<1x128xi1>, vector<1x128xf32>
    %408 = vector.shape_cast %378 : vector<1x128xf32> to vector<1x128xf32>
    %409 = vector.broadcast %408 : vector<1x128xf32> to vector<8x128xf32>
    %410 = arith.select %2, %409, %339 : vector<8x128xi1>, vector<8x128xf32>
    %411 = vector.shape_cast %381 : vector<1x128xf32> to vector<1x128xf32>
    %412 = vector.broadcast %411 : vector<1x128xf32> to vector<8x128xf32>
    %413 = arith.select %2, %412, %342 : vector<8x128xi1>, vector<8x128xf32>
    %414 = tpu.iota {dimensions = array<i32: 0>} : vector<8x128xi32>
    %c0_i32_108 = arith.constant 0 : i32
    %415 = vector.broadcast %c0_i32_108 : i32 to vector<8x128xi32>
    %416 = arith.cmpi eq, %414, %415 : vector<8x128xi32>
    %cst_109 = arith.constant 1.000000e+00 : f32
    %417 = vector.broadcast %cst_109 : f32 to vector<8x128xf32>
    %418 = arith.addf %410, %417 : vector<8x128xf32>
    %419 = arith.select %416, %418, %410 : vector<8x128xi1>, vector<8x128xf32>
    %420 = vector.shape_cast %371 : vector<1x128xi1> to vector<1x128xi1>
    %421 = vector.broadcast %420 : vector<1x128xi1> to vector<8x128xi1>
    %422 = arith.select %421, %419, %339 : vector<8x128xi1>, vector<8x128xf32>
    %423 = vector.shape_cast %371 : vector<1x128xi1> to vector<1x128xi1>
    %424 = vector.broadcast %423 : vector<1x128xi1> to vector<8x128xi1>
    %425 = arith.select %424, %413, %342 : vector<8x128xi1>, vector<8x128xf32>
    %426 = arith.select %371, %391, %343 : vector<1x128xi1>, vector<1x128xf32>
    %c5_i32 = arith.constant 5 : i32
    %427 = vector.extract_strided_slice %422 {offsets = [0, 0], sizes = [1, 128], strides = [1, 1]} : vector<8x128xf32> to vector<1x128xf32>
    %428 = vector.extract_strided_slice %425 {offsets = [0, 0], sizes = [1, 128], strides = [1, 1]} : vector<8x128xf32> to vector<1x128xf32>
    %429 = arith.subf %427, %428 : vector<1x128xf32>
    %430 = arith.addf %427, %428 : vector<1x128xf32>
    %cst_110 = arith.constant 3.000000e+00 : f32
    %431 = vector.broadcast %cst_110 : f32 to vector<1x128xf32>
    %432 = arith.cmpf ole, %430, %431 : vector<1x128xf32>
    %cst_111 = arith.constant 3.000000e+00 : f32
    %433 = vector.broadcast %cst_111 : f32 to vector<1x128xf32>
    %434 = arith.cmpf ogt, %429, %433 : vector<1x128xf32>
    %435 = arith.subf %430, %429 : vector<1x128xf32>
    %cst_112 = arith.constant 0.000000e+00 : f32
    %436 = vector.broadcast %cst_112 : f32 to vector<1x128xf32>
    %437 = arith.cmpf oeq, %435, %436 : vector<1x128xf32>
    %cst_113 = arith.constant 1.000000e+00 : f32
    %438 = vector.broadcast %cst_113 : f32 to vector<1x128xf32>
    %439 = arith.select %437, %438, %435 : vector<1x128xi1>, vector<1x128xf32>
    %440 = tpu.reciprocal %439 {approx = true} : vector<1x128xf32> -> vector<1x128xf32>
    %cst_114 = arith.constant 3.000000e+00 : f32
    %441 = vector.broadcast %cst_114 : f32 to vector<1x128xf32>
    %442 = arith.subf %441, %429 : vector<1x128xf32>
    %443 = arith.mulf %442, %440 : vector<1x128xf32>
    %cst_115 = arith.constant 0.000000e+00 : f32
    %444 = vector.broadcast %cst_115 : f32 to vector<1x128xf32>
    %445 = arith.select %434, %444, %443 : vector<1x128xi1>, vector<1x128xf32>
    %cst_116 = arith.constant 1.000000e+00 : f32
    %446 = vector.broadcast %cst_116 : f32 to vector<1x128xf32>
    %447 = arith.select %432, %446, %445 : vector<1x128xi1>, vector<1x128xf32>
    %cst_117 = arith.constant 1.000000e+00 : f32
    %448 = vector.broadcast %cst_117 : f32 to vector<1x128xf32>
    %449 = arith.subf %448, %447 : vector<1x128xf32>
    %450 = arith.index_cast %c5_i32 : i32 to index
    %c0_118 = arith.constant 0 : index
    %c0_119 = arith.constant 0 : index
    %451 = vector.load %arg1[%450, %c0_118, %c0_119] : memref<10x1x128xf32, #tpu.memory_space<vmem>>, vector<1x1x128xf32>
    %452 = vector.shape_cast %451 : vector<1x1x128xf32> to vector<1x128xf32>
    %453 = arith.cmpf olt, %452, %447 : vector<1x128xf32>
    %454 = arith.andi %453, %371 : vector<1x128xi1>
    %cst_120 = arith.constant 3.000000e+00 : f32
    %455 = vector.broadcast %cst_120 : f32 to vector<1x128xf32>
    %456 = arith.minimumf %430, %455 : vector<1x128xf32>
    %cst_121 = arith.constant 3.000000e+00 : f32
    %457 = vector.broadcast %cst_121 : f32 to vector<1x128xf32>
    %458 = arith.maximumf %429, %457 : vector<1x128xf32>
    %459 = arith.addf %429, %456 : vector<1x128xf32>
    %cst_122 = arith.constant 5.000000e-01 : f32
    %460 = vector.broadcast %cst_122 : f32 to vector<1x128xf32>
    %461 = arith.mulf %459, %460 : vector<1x128xf32>
    %462 = arith.subf %456, %429 : vector<1x128xf32>
    %cst_123 = arith.constant 5.000000e-01 : f32
    %463 = vector.broadcast %cst_123 : f32 to vector<1x128xf32>
    %464 = arith.mulf %462, %463 : vector<1x128xf32>
    %465 = arith.addf %458, %430 : vector<1x128xf32>
    %cst_124 = arith.constant 5.000000e-01 : f32
    %466 = vector.broadcast %cst_124 : f32 to vector<1x128xf32>
    %467 = arith.mulf %465, %466 : vector<1x128xf32>
    %468 = arith.subf %430, %458 : vector<1x128xf32>
    %cst_125 = arith.constant 5.000000e-01 : f32
    %469 = vector.broadcast %cst_125 : f32 to vector<1x128xf32>
    %470 = arith.mulf %468, %469 : vector<1x128xf32>
    %cst_126 = arith.constant 9.99999935E-39 : f32
    %471 = vector.broadcast %cst_126 : f32 to vector<1x128xf32>
    %472 = arith.maximumf %447, %471 : vector<1x128xf32>
    %473 = math.log %472 : vector<1x128xf32>
    %474 = arith.addf %426, %473 : vector<1x128xf32>
    %cst_127 = arith.constant 9.99999935E-39 : f32
    %475 = vector.broadcast %cst_127 : f32 to vector<1x128xf32>
    %476 = arith.maximumf %449, %475 : vector<1x128xf32>
    %477 = math.log %476 : vector<1x128xf32>
    %478 = arith.addf %426, %477 : vector<1x128xf32>
    %479 = vector.shape_cast %371 : vector<1x128xi1> to vector<1x128xi1>
    %480 = vector.broadcast %479 : vector<1x128xi1> to vector<8x128xi1>
    %481 = arith.select %480, %422, %398 : vector<8x128xi1>, vector<8x128xf32>
    %482 = vector.shape_cast %371 : vector<1x128xi1> to vector<1x128xi1>
    %483 = vector.broadcast %482 : vector<1x128xi1> to vector<8x128xi1>
    %484 = arith.select %483, %425, %401 : vector<8x128xi1>, vector<8x128xf32>
    %485 = arith.select %453, %461, %467 : vector<1x128xi1>, vector<1x128xf32>
    %486 = arith.select %371, %485, %403 : vector<1x128xi1>, vector<1x128xf32>
    %487 = arith.select %453, %464, %470 : vector<1x128xi1>, vector<1x128xf32>
    %488 = arith.select %371, %487, %405 : vector<1x128xi1>, vector<1x128xf32>
    %489 = arith.select %453, %474, %478 : vector<1x128xi1>, vector<1x128xf32>
    %490 = arith.select %371, %489, %407 : vector<1x128xi1>, vector<1x128xf32>
    %491 = vector.shape_cast %461 : vector<1x128xf32> to vector<1x128xf32>
    %492 = vector.broadcast %491 : vector<1x128xf32> to vector<8x128xf32>
    %493 = arith.select %2, %492, %422 : vector<8x128xi1>, vector<8x128xf32>
    %494 = vector.shape_cast %464 : vector<1x128xf32> to vector<1x128xf32>
    %495 = vector.broadcast %494 : vector<1x128xf32> to vector<8x128xf32>
    %496 = arith.select %2, %495, %425 : vector<8x128xi1>, vector<8x128xf32>
    %497 = tpu.iota {dimensions = array<i32: 0>} : vector<8x128xi32>
    %c0_i32_128 = arith.constant 0 : i32
    %498 = vector.broadcast %c0_i32_128 : i32 to vector<8x128xi32>
    %499 = arith.cmpi eq, %497, %498 : vector<8x128xi32>
    %cst_129 = arith.constant 1.000000e+00 : f32
    %500 = vector.broadcast %cst_129 : f32 to vector<8x128xf32>
    %501 = arith.addf %493, %500 : vector<8x128xf32>
    %502 = arith.select %499, %501, %493 : vector<8x128xi1>, vector<8x128xf32>
    %503 = vector.shape_cast %454 : vector<1x128xi1> to vector<1x128xi1>
    %504 = vector.broadcast %503 : vector<1x128xi1> to vector<8x128xi1>
    %505 = arith.select %504, %502, %422 : vector<8x128xi1>, vector<8x128xf32>
    %506 = vector.shape_cast %454 : vector<1x128xi1> to vector<1x128xi1>
    %507 = vector.broadcast %506 : vector<1x128xi1> to vector<8x128xi1>
    %508 = arith.select %507, %496, %425 : vector<8x128xi1>, vector<8x128xf32>
    %509 = arith.select %454, %474, %426 : vector<1x128xi1>, vector<1x128xf32>
    %c6_i32 = arith.constant 6 : i32
    %510 = vector.extract_strided_slice %505 {offsets = [0, 0], sizes = [1, 128], strides = [1, 1]} : vector<8x128xf32> to vector<1x128xf32>
    %511 = vector.extract_strided_slice %508 {offsets = [0, 0], sizes = [1, 128], strides = [1, 1]} : vector<8x128xf32> to vector<1x128xf32>
    %512 = arith.subf %510, %511 : vector<1x128xf32>
    %513 = arith.addf %510, %511 : vector<1x128xf32>
    %cst_130 = arith.constant 3.000000e+00 : f32
    %514 = vector.broadcast %cst_130 : f32 to vector<1x128xf32>
    %515 = arith.cmpf ole, %513, %514 : vector<1x128xf32>
    %cst_131 = arith.constant 3.000000e+00 : f32
    %516 = vector.broadcast %cst_131 : f32 to vector<1x128xf32>
    %517 = arith.cmpf ogt, %512, %516 : vector<1x128xf32>
    %518 = arith.subf %513, %512 : vector<1x128xf32>
    %cst_132 = arith.constant 0.000000e+00 : f32
    %519 = vector.broadcast %cst_132 : f32 to vector<1x128xf32>
    %520 = arith.cmpf oeq, %518, %519 : vector<1x128xf32>
    %cst_133 = arith.constant 1.000000e+00 : f32
    %521 = vector.broadcast %cst_133 : f32 to vector<1x128xf32>
    %522 = arith.select %520, %521, %518 : vector<1x128xi1>, vector<1x128xf32>
    %523 = tpu.reciprocal %522 {approx = true} : vector<1x128xf32> -> vector<1x128xf32>
    %cst_134 = arith.constant 3.000000e+00 : f32
    %524 = vector.broadcast %cst_134 : f32 to vector<1x128xf32>
    %525 = arith.subf %524, %512 : vector<1x128xf32>
    %526 = arith.mulf %525, %523 : vector<1x128xf32>
    %cst_135 = arith.constant 0.000000e+00 : f32
    %527 = vector.broadcast %cst_135 : f32 to vector<1x128xf32>
    %528 = arith.select %517, %527, %526 : vector<1x128xi1>, vector<1x128xf32>
    %cst_136 = arith.constant 1.000000e+00 : f32
    %529 = vector.broadcast %cst_136 : f32 to vector<1x128xf32>
    %530 = arith.select %515, %529, %528 : vector<1x128xi1>, vector<1x128xf32>
    %cst_137 = arith.constant 1.000000e+00 : f32
    %531 = vector.broadcast %cst_137 : f32 to vector<1x128xf32>
    %532 = arith.subf %531, %530 : vector<1x128xf32>
    %533 = arith.index_cast %c6_i32 : i32 to index
    %c0_138 = arith.constant 0 : index
    %c0_139 = arith.constant 0 : index
    %534 = vector.load %arg1[%533, %c0_138, %c0_139] : memref<10x1x128xf32, #tpu.memory_space<vmem>>, vector<1x1x128xf32>
    %535 = vector.shape_cast %534 : vector<1x1x128xf32> to vector<1x128xf32>
    %536 = arith.cmpf olt, %535, %530 : vector<1x128xf32>
    %537 = arith.andi %536, %454 : vector<1x128xi1>
    %cst_140 = arith.constant 3.000000e+00 : f32
    %538 = vector.broadcast %cst_140 : f32 to vector<1x128xf32>
    %539 = arith.minimumf %513, %538 : vector<1x128xf32>
    %cst_141 = arith.constant 3.000000e+00 : f32
    %540 = vector.broadcast %cst_141 : f32 to vector<1x128xf32>
    %541 = arith.maximumf %512, %540 : vector<1x128xf32>
    %542 = arith.addf %512, %539 : vector<1x128xf32>
    %cst_142 = arith.constant 5.000000e-01 : f32
    %543 = vector.broadcast %cst_142 : f32 to vector<1x128xf32>
    %544 = arith.mulf %542, %543 : vector<1x128xf32>
    %545 = arith.subf %539, %512 : vector<1x128xf32>
    %cst_143 = arith.constant 5.000000e-01 : f32
    %546 = vector.broadcast %cst_143 : f32 to vector<1x128xf32>
    %547 = arith.mulf %545, %546 : vector<1x128xf32>
    %548 = arith.addf %541, %513 : vector<1x128xf32>
    %cst_144 = arith.constant 5.000000e-01 : f32
    %549 = vector.broadcast %cst_144 : f32 to vector<1x128xf32>
    %550 = arith.mulf %548, %549 : vector<1x128xf32>
    %551 = arith.subf %513, %541 : vector<1x128xf32>
    %cst_145 = arith.constant 5.000000e-01 : f32
    %552 = vector.broadcast %cst_145 : f32 to vector<1x128xf32>
    %553 = arith.mulf %551, %552 : vector<1x128xf32>
    %cst_146 = arith.constant 9.99999935E-39 : f32
    %554 = vector.broadcast %cst_146 : f32 to vector<1x128xf32>
    %555 = arith.maximumf %530, %554 : vector<1x128xf32>
    %556 = math.log %555 : vector<1x128xf32>
    %557 = arith.addf %509, %556 : vector<1x128xf32>
    %cst_147 = arith.constant 9.99999935E-39 : f32
    %558 = vector.broadcast %cst_147 : f32 to vector<1x128xf32>
    %559 = arith.maximumf %532, %558 : vector<1x128xf32>
    %560 = math.log %559 : vector<1x128xf32>
    %561 = arith.addf %509, %560 : vector<1x128xf32>
    %562 = vector.shape_cast %454 : vector<1x128xi1> to vector<1x128xi1>
    %563 = vector.broadcast %562 : vector<1x128xi1> to vector<8x128xi1>
    %564 = arith.select %563, %505, %481 : vector<8x128xi1>, vector<8x128xf32>
    %565 = vector.shape_cast %454 : vector<1x128xi1> to vector<1x128xi1>
    %566 = vector.broadcast %565 : vector<1x128xi1> to vector<8x128xi1>
    %567 = arith.select %566, %508, %484 : vector<8x128xi1>, vector<8x128xf32>
    %568 = arith.select %536, %544, %550 : vector<1x128xi1>, vector<1x128xf32>
    %569 = arith.select %454, %568, %486 : vector<1x128xi1>, vector<1x128xf32>
    %570 = arith.select %536, %547, %553 : vector<1x128xi1>, vector<1x128xf32>
    %571 = arith.select %454, %570, %488 : vector<1x128xi1>, vector<1x128xf32>
    %572 = arith.select %536, %557, %561 : vector<1x128xi1>, vector<1x128xf32>
    %573 = arith.select %454, %572, %490 : vector<1x128xi1>, vector<1x128xf32>
    %574 = vector.shape_cast %544 : vector<1x128xf32> to vector<1x128xf32>
    %575 = vector.broadcast %574 : vector<1x128xf32> to vector<8x128xf32>
    %576 = arith.select %2, %575, %505 : vector<8x128xi1>, vector<8x128xf32>
    %577 = vector.shape_cast %547 : vector<1x128xf32> to vector<1x128xf32>
    %578 = vector.broadcast %577 : vector<1x128xf32> to vector<8x128xf32>
    %579 = arith.select %2, %578, %508 : vector<8x128xi1>, vector<8x128xf32>
    %580 = tpu.iota {dimensions = array<i32: 0>} : vector<8x128xi32>
    %c0_i32_148 = arith.constant 0 : i32
    %581 = vector.broadcast %c0_i32_148 : i32 to vector<8x128xi32>
    %582 = arith.cmpi eq, %580, %581 : vector<8x128xi32>
    %cst_149 = arith.constant 1.000000e+00 : f32
    %583 = vector.broadcast %cst_149 : f32 to vector<8x128xf32>
    %584 = arith.addf %576, %583 : vector<8x128xf32>
    %585 = arith.select %582, %584, %576 : vector<8x128xi1>, vector<8x128xf32>
    %586 = vector.shape_cast %537 : vector<1x128xi1> to vector<1x128xi1>
    %587 = vector.broadcast %586 : vector<1x128xi1> to vector<8x128xi1>
    %588 = arith.select %587, %585, %505 : vector<8x128xi1>, vector<8x128xf32>
    %589 = vector.shape_cast %537 : vector<1x128xi1> to vector<1x128xi1>
    %590 = vector.broadcast %589 : vector<1x128xi1> to vector<8x128xi1>
    %591 = arith.select %590, %579, %508 : vector<8x128xi1>, vector<8x128xf32>
    %592 = arith.select %537, %557, %509 : vector<1x128xi1>, vector<1x128xf32>
    %c7_i32 = arith.constant 7 : i32
    %593 = vector.extract_strided_slice %588 {offsets = [0, 0], sizes = [1, 128], strides = [1, 1]} : vector<8x128xf32> to vector<1x128xf32>
    %594 = vector.extract_strided_slice %591 {offsets = [0, 0], sizes = [1, 128], strides = [1, 1]} : vector<8x128xf32> to vector<1x128xf32>
    %595 = arith.subf %593, %594 : vector<1x128xf32>
    %596 = arith.addf %593, %594 : vector<1x128xf32>
    %cst_150 = arith.constant 3.000000e+00 : f32
    %597 = vector.broadcast %cst_150 : f32 to vector<1x128xf32>
    %598 = arith.cmpf ole, %596, %597 : vector<1x128xf32>
    %cst_151 = arith.constant 3.000000e+00 : f32
    %599 = vector.broadcast %cst_151 : f32 to vector<1x128xf32>
    %600 = arith.cmpf ogt, %595, %599 : vector<1x128xf32>
    %601 = arith.subf %596, %595 : vector<1x128xf32>
    %cst_152 = arith.constant 0.000000e+00 : f32
    %602 = vector.broadcast %cst_152 : f32 to vector<1x128xf32>
    %603 = arith.cmpf oeq, %601, %602 : vector<1x128xf32>
    %cst_153 = arith.constant 1.000000e+00 : f32
    %604 = vector.broadcast %cst_153 : f32 to vector<1x128xf32>
    %605 = arith.select %603, %604, %601 : vector<1x128xi1>, vector<1x128xf32>
    %606 = tpu.reciprocal %605 {approx = true} : vector<1x128xf32> -> vector<1x128xf32>
    %cst_154 = arith.constant 3.000000e+00 : f32
    %607 = vector.broadcast %cst_154 : f32 to vector<1x128xf32>
    %608 = arith.subf %607, %595 : vector<1x128xf32>
    %609 = arith.mulf %608, %606 : vector<1x128xf32>
    %cst_155 = arith.constant 0.000000e+00 : f32
    %610 = vector.broadcast %cst_155 : f32 to vector<1x128xf32>
    %611 = arith.select %600, %610, %609 : vector<1x128xi1>, vector<1x128xf32>
    %cst_156 = arith.constant 1.000000e+00 : f32
    %612 = vector.broadcast %cst_156 : f32 to vector<1x128xf32>
    %613 = arith.select %598, %612, %611 : vector<1x128xi1>, vector<1x128xf32>
    %cst_157 = arith.constant 1.000000e+00 : f32
    %614 = vector.broadcast %cst_157 : f32 to vector<1x128xf32>
    %615 = arith.subf %614, %613 : vector<1x128xf32>
    %616 = arith.index_cast %c7_i32 : i32 to index
    %c0_158 = arith.constant 0 : index
    %c0_159 = arith.constant 0 : index
    %617 = vector.load %arg1[%616, %c0_158, %c0_159] : memref<10x1x128xf32, #tpu.memory_space<vmem>>, vector<1x1x128xf32>
    %618 = vector.shape_cast %617 : vector<1x1x128xf32> to vector<1x128xf32>
    %619 = arith.cmpf olt, %618, %613 : vector<1x128xf32>
    %620 = arith.andi %619, %537 : vector<1x128xi1>
    %cst_160 = arith.constant 3.000000e+00 : f32
    %621 = vector.broadcast %cst_160 : f32 to vector<1x128xf32>
    %622 = arith.minimumf %596, %621 : vector<1x128xf32>
    %cst_161 = arith.constant 3.000000e+00 : f32
    %623 = vector.broadcast %cst_161 : f32 to vector<1x128xf32>
    %624 = arith.maximumf %595, %623 : vector<1x128xf32>
    %625 = arith.addf %595, %622 : vector<1x128xf32>
    %cst_162 = arith.constant 5.000000e-01 : f32
    %626 = vector.broadcast %cst_162 : f32 to vector<1x128xf32>
    %627 = arith.mulf %625, %626 : vector<1x128xf32>
    %628 = arith.subf %622, %595 : vector<1x128xf32>
    %cst_163 = arith.constant 5.000000e-01 : f32
    %629 = vector.broadcast %cst_163 : f32 to vector<1x128xf32>
    %630 = arith.mulf %628, %629 : vector<1x128xf32>
    %631 = arith.addf %624, %596 : vector<1x128xf32>
    %cst_164 = arith.constant 5.000000e-01 : f32
    %632 = vector.broadcast %cst_164 : f32 to vector<1x128xf32>
    %633 = arith.mulf %631, %632 : vector<1x128xf32>
    %634 = arith.subf %596, %624 : vector<1x128xf32>
    %cst_165 = arith.constant 5.000000e-01 : f32
    %635 = vector.broadcast %cst_165 : f32 to vector<1x128xf32>
    %636 = arith.mulf %634, %635 : vector<1x128xf32>
    %cst_166 = arith.constant 9.99999935E-39 : f32
    %637 = vector.broadcast %cst_166 : f32 to vector<1x128xf32>
    %638 = arith.maximumf %613, %637 : vector<1x128xf32>
    %639 = math.log %638 : vector<1x128xf32>
    %640 = arith.addf %592, %639 : vector<1x128xf32>
    %cst_167 = arith.constant 9.99999935E-39 : f32
    %641 = vector.broadcast %cst_167 : f32 to vector<1x128xf32>
    %642 = arith.maximumf %615, %641 : vector<1x128xf32>
    %643 = math.log %642 : vector<1x128xf32>
    %644 = arith.addf %592, %643 : vector<1x128xf32>
    %645 = vector.shape_cast %537 : vector<1x128xi1> to vector<1x128xi1>
    %646 = vector.broadcast %645 : vector<1x128xi1> to vector<8x128xi1>
    %647 = arith.select %646, %588, %564 : vector<8x128xi1>, vector<8x128xf32>
    %648 = vector.shape_cast %537 : vector<1x128xi1> to vector<1x128xi1>
    %649 = vector.broadcast %648 : vector<1x128xi1> to vector<8x128xi1>
    %650 = arith.select %649, %591, %567 : vector<8x128xi1>, vector<8x128xf32>
    %651 = arith.select %619, %627, %633 : vector<1x128xi1>, vector<1x128xf32>
    %652 = arith.select %537, %651, %569 : vector<1x128xi1>, vector<1x128xf32>
    %653 = arith.select %619, %630, %636 : vector<1x128xi1>, vector<1x128xf32>
    %654 = arith.select %537, %653, %571 : vector<1x128xi1>, vector<1x128xf32>
    %655 = arith.select %619, %640, %644 : vector<1x128xi1>, vector<1x128xf32>
    %656 = arith.select %537, %655, %573 : vector<1x128xi1>, vector<1x128xf32>
    %657 = vector.shape_cast %627 : vector<1x128xf32> to vector<1x128xf32>
    %658 = vector.broadcast %657 : vector<1x128xf32> to vector<8x128xf32>
    %659 = arith.select %2, %658, %588 : vector<8x128xi1>, vector<8x128xf32>
    %660 = vector.shape_cast %630 : vector<1x128xf32> to vector<1x128xf32>
    %661 = vector.broadcast %660 : vector<1x128xf32> to vector<8x128xf32>
    %662 = arith.select %2, %661, %591 : vector<8x128xi1>, vector<8x128xf32>
    %663 = tpu.iota {dimensions = array<i32: 0>} : vector<8x128xi32>
    %c0_i32_168 = arith.constant 0 : i32
    %664 = vector.broadcast %c0_i32_168 : i32 to vector<8x128xi32>
    %665 = arith.cmpi eq, %663, %664 : vector<8x128xi32>
    %cst_169 = arith.constant 1.000000e+00 : f32
    %666 = vector.broadcast %cst_169 : f32 to vector<8x128xf32>
    %667 = arith.addf %659, %666 : vector<8x128xf32>
    %668 = arith.select %665, %667, %659 : vector<8x128xi1>, vector<8x128xf32>
    %669 = vector.shape_cast %620 : vector<1x128xi1> to vector<1x128xi1>
    %670 = vector.broadcast %669 : vector<1x128xi1> to vector<8x128xi1>
    %671 = arith.select %670, %668, %588 : vector<8x128xi1>, vector<8x128xf32>
    %672 = vector.shape_cast %620 : vector<1x128xi1> to vector<1x128xi1>
    %673 = vector.broadcast %672 : vector<1x128xi1> to vector<8x128xi1>
    %674 = arith.select %673, %662, %591 : vector<8x128xi1>, vector<8x128xf32>
    %675 = arith.select %620, %640, %592 : vector<1x128xi1>, vector<1x128xf32>
    %c8_i32 = arith.constant 8 : i32
    %676 = vector.extract_strided_slice %671 {offsets = [0, 0], sizes = [1, 128], strides = [1, 1]} : vector<8x128xf32> to vector<1x128xf32>
    %677 = vector.extract_strided_slice %674 {offsets = [0, 0], sizes = [1, 128], strides = [1, 1]} : vector<8x128xf32> to vector<1x128xf32>
    %678 = arith.subf %676, %677 : vector<1x128xf32>
    %679 = arith.addf %676, %677 : vector<1x128xf32>
    %cst_170 = arith.constant 3.000000e+00 : f32
    %680 = vector.broadcast %cst_170 : f32 to vector<1x128xf32>
    %681 = arith.cmpf ole, %679, %680 : vector<1x128xf32>
    %cst_171 = arith.constant 3.000000e+00 : f32
    %682 = vector.broadcast %cst_171 : f32 to vector<1x128xf32>
    %683 = arith.cmpf ogt, %678, %682 : vector<1x128xf32>
    %684 = arith.subf %679, %678 : vector<1x128xf32>
    %cst_172 = arith.constant 0.000000e+00 : f32
    %685 = vector.broadcast %cst_172 : f32 to vector<1x128xf32>
    %686 = arith.cmpf oeq, %684, %685 : vector<1x128xf32>
    %cst_173 = arith.constant 1.000000e+00 : f32
    %687 = vector.broadcast %cst_173 : f32 to vector<1x128xf32>
    %688 = arith.select %686, %687, %684 : vector<1x128xi1>, vector<1x128xf32>
    %689 = tpu.reciprocal %688 {approx = true} : vector<1x128xf32> -> vector<1x128xf32>
    %cst_174 = arith.constant 3.000000e+00 : f32
    %690 = vector.broadcast %cst_174 : f32 to vector<1x128xf32>
    %691 = arith.subf %690, %678 : vector<1x128xf32>
    %692 = arith.mulf %691, %689 : vector<1x128xf32>
    %cst_175 = arith.constant 0.000000e+00 : f32
    %693 = vector.broadcast %cst_175 : f32 to vector<1x128xf32>
    %694 = arith.select %683, %693, %692 : vector<1x128xi1>, vector<1x128xf32>
    %cst_176 = arith.constant 1.000000e+00 : f32
    %695 = vector.broadcast %cst_176 : f32 to vector<1x128xf32>
    %696 = arith.select %681, %695, %694 : vector<1x128xi1>, vector<1x128xf32>
    %cst_177 = arith.constant 1.000000e+00 : f32
    %697 = vector.broadcast %cst_177 : f32 to vector<1x128xf32>
    %698 = arith.subf %697, %696 : vector<1x128xf32>
    %699 = arith.index_cast %c8_i32 : i32 to index
    %c0_178 = arith.constant 0 : index
    %c0_179 = arith.constant 0 : index
    %700 = vector.load %arg1[%699, %c0_178, %c0_179] : memref<10x1x128xf32, #tpu.memory_space<vmem>>, vector<1x1x128xf32>
    %701 = vector.shape_cast %700 : vector<1x1x128xf32> to vector<1x128xf32>
    %702 = arith.cmpf olt, %701, %696 : vector<1x128xf32>
    %703 = arith.andi %702, %620 : vector<1x128xi1>
    %cst_180 = arith.constant 3.000000e+00 : f32
    %704 = vector.broadcast %cst_180 : f32 to vector<1x128xf32>
    %705 = arith.minimumf %679, %704 : vector<1x128xf32>
    %cst_181 = arith.constant 3.000000e+00 : f32
    %706 = vector.broadcast %cst_181 : f32 to vector<1x128xf32>
    %707 = arith.maximumf %678, %706 : vector<1x128xf32>
    %708 = arith.addf %678, %705 : vector<1x128xf32>
    %cst_182 = arith.constant 5.000000e-01 : f32
    %709 = vector.broadcast %cst_182 : f32 to vector<1x128xf32>
    %710 = arith.mulf %708, %709 : vector<1x128xf32>
    %711 = arith.subf %705, %678 : vector<1x128xf32>
    %cst_183 = arith.constant 5.000000e-01 : f32
    %712 = vector.broadcast %cst_183 : f32 to vector<1x128xf32>
    %713 = arith.mulf %711, %712 : vector<1x128xf32>
    %714 = arith.addf %707, %679 : vector<1x128xf32>
    %cst_184 = arith.constant 5.000000e-01 : f32
    %715 = vector.broadcast %cst_184 : f32 to vector<1x128xf32>
    %716 = arith.mulf %714, %715 : vector<1x128xf32>
    %717 = arith.subf %679, %707 : vector<1x128xf32>
    %cst_185 = arith.constant 5.000000e-01 : f32
    %718 = vector.broadcast %cst_185 : f32 to vector<1x128xf32>
    %719 = arith.mulf %717, %718 : vector<1x128xf32>
    %cst_186 = arith.constant 9.99999935E-39 : f32
    %720 = vector.broadcast %cst_186 : f32 to vector<1x128xf32>
    %721 = arith.maximumf %696, %720 : vector<1x128xf32>
    %722 = math.log %721 : vector<1x128xf32>
    %723 = arith.addf %675, %722 : vector<1x128xf32>
    %cst_187 = arith.constant 9.99999935E-39 : f32
    %724 = vector.broadcast %cst_187 : f32 to vector<1x128xf32>
    %725 = arith.maximumf %698, %724 : vector<1x128xf32>
    %726 = math.log %725 : vector<1x128xf32>
    %727 = arith.addf %675, %726 : vector<1x128xf32>
    %728 = vector.shape_cast %620 : vector<1x128xi1> to vector<1x128xi1>
    %729 = vector.broadcast %728 : vector<1x128xi1> to vector<8x128xi1>
    %730 = arith.select %729, %671, %647 : vector<8x128xi1>, vector<8x128xf32>
    %731 = vector.shape_cast %620 : vector<1x128xi1> to vector<1x128xi1>
    %732 = vector.broadcast %731 : vector<1x128xi1> to vector<8x128xi1>
    %733 = arith.select %732, %674, %650 : vector<8x128xi1>, vector<8x128xf32>
    %734 = arith.select %702, %710, %716 : vector<1x128xi1>, vector<1x128xf32>
    %735 = arith.select %620, %734, %652 : vector<1x128xi1>, vector<1x128xf32>
    %736 = arith.select %702, %713, %719 : vector<1x128xi1>, vector<1x128xf32>
    %737 = arith.select %620, %736, %654 : vector<1x128xi1>, vector<1x128xf32>
    %738 = arith.select %702, %723, %727 : vector<1x128xi1>, vector<1x128xf32>
    %739 = arith.select %620, %738, %656 : vector<1x128xi1>, vector<1x128xf32>
    %740 = vector.shape_cast %710 : vector<1x128xf32> to vector<1x128xf32>
    %741 = vector.broadcast %740 : vector<1x128xf32> to vector<8x128xf32>
    %742 = arith.select %2, %741, %671 : vector<8x128xi1>, vector<8x128xf32>
    %743 = vector.shape_cast %713 : vector<1x128xf32> to vector<1x128xf32>
    %744 = vector.broadcast %743 : vector<1x128xf32> to vector<8x128xf32>
    %745 = arith.select %2, %744, %674 : vector<8x128xi1>, vector<8x128xf32>
    %746 = tpu.iota {dimensions = array<i32: 0>} : vector<8x128xi32>
    %c0_i32_188 = arith.constant 0 : i32
    %747 = vector.broadcast %c0_i32_188 : i32 to vector<8x128xi32>
    %748 = arith.cmpi eq, %746, %747 : vector<8x128xi32>
    %cst_189 = arith.constant 1.000000e+00 : f32
    %749 = vector.broadcast %cst_189 : f32 to vector<8x128xf32>
    %750 = arith.addf %742, %749 : vector<8x128xf32>
    %751 = arith.select %748, %750, %742 : vector<8x128xi1>, vector<8x128xf32>
    %752 = vector.shape_cast %703 : vector<1x128xi1> to vector<1x128xi1>
    %753 = vector.broadcast %752 : vector<1x128xi1> to vector<8x128xi1>
    %754 = arith.select %753, %751, %671 : vector<8x128xi1>, vector<8x128xf32>
    %755 = vector.shape_cast %703 : vector<1x128xi1> to vector<1x128xi1>
    %756 = vector.broadcast %755 : vector<1x128xi1> to vector<8x128xi1>
    %757 = arith.select %756, %745, %674 : vector<8x128xi1>, vector<8x128xf32>
    %758 = arith.select %703, %723, %675 : vector<1x128xi1>, vector<1x128xf32>
    %c9_i32 = arith.constant 9 : i32
    %759 = vector.extract_strided_slice %754 {offsets = [0, 0], sizes = [1, 128], strides = [1, 1]} : vector<8x128xf32> to vector<1x128xf32>
    %760 = vector.extract_strided_slice %757 {offsets = [0, 0], sizes = [1, 128], strides = [1, 1]} : vector<8x128xf32> to vector<1x128xf32>
    %761 = arith.subf %759, %760 : vector<1x128xf32>
    %762 = arith.addf %759, %760 : vector<1x128xf32>
    %cst_190 = arith.constant 3.000000e+00 : f32
    %763 = vector.broadcast %cst_190 : f32 to vector<1x128xf32>
    %764 = arith.cmpf ole, %762, %763 : vector<1x128xf32>
    %cst_191 = arith.constant 3.000000e+00 : f32
    %765 = vector.broadcast %cst_191 : f32 to vector<1x128xf32>
    %766 = arith.cmpf ogt, %761, %765 : vector<1x128xf32>
    %767 = arith.subf %762, %761 : vector<1x128xf32>
    %cst_192 = arith.constant 0.000000e+00 : f32
    %768 = vector.broadcast %cst_192 : f32 to vector<1x128xf32>
    %769 = arith.cmpf oeq, %767, %768 : vector<1x128xf32>
    %cst_193 = arith.constant 1.000000e+00 : f32
    %770 = vector.broadcast %cst_193 : f32 to vector<1x128xf32>
    %771 = arith.select %769, %770, %767 : vector<1x128xi1>, vector<1x128xf32>
    %772 = tpu.reciprocal %771 {approx = true} : vector<1x128xf32> -> vector<1x128xf32>
    %cst_194 = arith.constant 3.000000e+00 : f32
    %773 = vector.broadcast %cst_194 : f32 to vector<1x128xf32>
    %774 = arith.subf %773, %761 : vector<1x128xf32>
    %775 = arith.mulf %774, %772 : vector<1x128xf32>
    %cst_195 = arith.constant 0.000000e+00 : f32
    %776 = vector.broadcast %cst_195 : f32 to vector<1x128xf32>
    %777 = arith.select %766, %776, %775 : vector<1x128xi1>, vector<1x128xf32>
    %cst_196 = arith.constant 1.000000e+00 : f32
    %778 = vector.broadcast %cst_196 : f32 to vector<1x128xf32>
    %779 = arith.select %764, %778, %777 : vector<1x128xi1>, vector<1x128xf32>
    %cst_197 = arith.constant 1.000000e+00 : f32
    %780 = vector.broadcast %cst_197 : f32 to vector<1x128xf32>
    %781 = arith.subf %780, %779 : vector<1x128xf32>
    %782 = arith.index_cast %c9_i32 : i32 to index
    %c0_198 = arith.constant 0 : index
    %c0_199 = arith.constant 0 : index
    %783 = vector.load %arg1[%782, %c0_198, %c0_199] : memref<10x1x128xf32, #tpu.memory_space<vmem>>, vector<1x1x128xf32>
    %784 = vector.shape_cast %783 : vector<1x1x128xf32> to vector<1x128xf32>
    %785 = arith.cmpf olt, %784, %779 : vector<1x128xf32>
    %786 = arith.andi %785, %703 : vector<1x128xi1>
    %cst_200 = arith.constant 3.000000e+00 : f32
    %787 = vector.broadcast %cst_200 : f32 to vector<1x128xf32>
    %788 = arith.minimumf %762, %787 : vector<1x128xf32>
    %cst_201 = arith.constant 3.000000e+00 : f32
    %789 = vector.broadcast %cst_201 : f32 to vector<1x128xf32>
    %790 = arith.maximumf %761, %789 : vector<1x128xf32>
    %791 = arith.addf %761, %788 : vector<1x128xf32>
    %cst_202 = arith.constant 5.000000e-01 : f32
    %792 = vector.broadcast %cst_202 : f32 to vector<1x128xf32>
    %793 = arith.mulf %791, %792 : vector<1x128xf32>
    %794 = arith.subf %788, %761 : vector<1x128xf32>
    %cst_203 = arith.constant 5.000000e-01 : f32
    %795 = vector.broadcast %cst_203 : f32 to vector<1x128xf32>
    %796 = arith.mulf %794, %795 : vector<1x128xf32>
    %797 = arith.addf %790, %762 : vector<1x128xf32>
    %cst_204 = arith.constant 5.000000e-01 : f32
    %798 = vector.broadcast %cst_204 : f32 to vector<1x128xf32>
    %799 = arith.mulf %797, %798 : vector<1x128xf32>
    %800 = arith.subf %762, %790 : vector<1x128xf32>
    %cst_205 = arith.constant 5.000000e-01 : f32
    %801 = vector.broadcast %cst_205 : f32 to vector<1x128xf32>
    %802 = arith.mulf %800, %801 : vector<1x128xf32>
    %cst_206 = arith.constant 9.99999935E-39 : f32
    %803 = vector.broadcast %cst_206 : f32 to vector<1x128xf32>
    %804 = arith.maximumf %779, %803 : vector<1x128xf32>
    %805 = math.log %804 : vector<1x128xf32>
    %806 = arith.addf %758, %805 : vector<1x128xf32>
    %cst_207 = arith.constant 9.99999935E-39 : f32
    %807 = vector.broadcast %cst_207 : f32 to vector<1x128xf32>
    %808 = arith.maximumf %781, %807 : vector<1x128xf32>
    %809 = math.log %808 : vector<1x128xf32>
    %810 = arith.addf %758, %809 : vector<1x128xf32>
    %811 = vector.shape_cast %703 : vector<1x128xi1> to vector<1x128xi1>
    %812 = vector.broadcast %811 : vector<1x128xi1> to vector<8x128xi1>
    %813 = arith.select %812, %754, %730 : vector<8x128xi1>, vector<8x128xf32>
    %814 = vector.shape_cast %703 : vector<1x128xi1> to vector<1x128xi1>
    %815 = vector.broadcast %814 : vector<1x128xi1> to vector<8x128xi1>
    %816 = arith.select %815, %757, %733 : vector<8x128xi1>, vector<8x128xf32>
    %817 = arith.select %785, %793, %799 : vector<1x128xi1>, vector<1x128xf32>
    %818 = arith.select %703, %817, %735 : vector<1x128xi1>, vector<1x128xf32>
    %819 = arith.select %785, %796, %802 : vector<1x128xi1>, vector<1x128xf32>
    %820 = arith.select %703, %819, %737 : vector<1x128xi1>, vector<1x128xf32>
    %821 = arith.select %785, %806, %810 : vector<1x128xi1>, vector<1x128xf32>
    %822 = arith.select %703, %821, %739 : vector<1x128xi1>, vector<1x128xf32>
    %823 = vector.shape_cast %793 : vector<1x128xf32> to vector<1x128xf32>
    %824 = vector.broadcast %823 : vector<1x128xf32> to vector<8x128xf32>
    %825 = arith.select %2, %824, %754 : vector<8x128xi1>, vector<8x128xf32>
    %826 = vector.shape_cast %796 : vector<1x128xf32> to vector<1x128xf32>
    %827 = vector.broadcast %826 : vector<1x128xf32> to vector<8x128xf32>
    %828 = arith.select %2, %827, %757 : vector<8x128xi1>, vector<8x128xf32>
    %829 = tpu.iota {dimensions = array<i32: 0>} : vector<8x128xi32>
    %c0_i32_208 = arith.constant 0 : i32
    %830 = vector.broadcast %c0_i32_208 : i32 to vector<8x128xi32>
    %831 = arith.cmpi eq, %829, %830 : vector<8x128xi32>
    %cst_209 = arith.constant 1.000000e+00 : f32
    %832 = vector.broadcast %cst_209 : f32 to vector<8x128xf32>
    %833 = arith.addf %825, %832 : vector<8x128xf32>
    %834 = arith.select %831, %833, %825 : vector<8x128xi1>, vector<8x128xf32>
    %835 = vector.shape_cast %786 : vector<1x128xi1> to vector<1x128xi1>
    %836 = vector.broadcast %835 : vector<1x128xi1> to vector<8x128xi1>
    %837 = arith.select %836, %834, %754 : vector<8x128xi1>, vector<8x128xf32>
    %838 = vector.shape_cast %786 : vector<1x128xi1> to vector<1x128xi1>
    %839 = vector.broadcast %838 : vector<1x128xi1> to vector<8x128xi1>
    %840 = arith.select %839, %828, %757 : vector<8x128xi1>, vector<8x128xf32>
    %841 = arith.select %786, %806, %758 : vector<1x128xi1>, vector<1x128xf32>
    %c10_i32 = arith.constant 10 : i32
    %842 = vector.shape_cast %818 : vector<1x128xf32> to vector<1x128xf32>
    %843 = vector.broadcast %842 : vector<1x128xf32> to vector<8x128xf32>
    %844 = arith.select %2, %843, %813 : vector<8x128xi1>, vector<8x128xf32>
    %c0_210 = arith.constant 0 : index
    %c0_211 = arith.constant 0 : index
    %845 = vector.load %arg5[%c0_210, %c0_211] : memref<8x128xf32, #tpu.memory_space<vmem>>, vector<8x128xf32>
    tpu.vector_store %arg5[%c0_210, %c0_211], %844 {strides = array<i32>} : memref<8x128xf32, #tpu.memory_space<vmem>>, vector<8x128xf32>,
    %846 = vector.shape_cast %820 : vector<1x128xf32> to vector<1x128xf32>
    %847 = vector.broadcast %846 : vector<1x128xf32> to vector<8x128xf32>
    %848 = arith.select %2, %847, %816 : vector<8x128xi1>, vector<8x128xf32>
    %c0_212 = arith.constant 0 : index
    %c0_213 = arith.constant 0 : index
    %849 = vector.load %arg6[%c0_212, %c0_213] : memref<8x128xf32, #tpu.memory_space<vmem>>, vector<8x128xf32>
    tpu.vector_store %arg6[%c0_212, %c0_213], %848 {strides = array<i32>} : memref<8x128xf32, #tpu.memory_space<vmem>>, vector<8x128xf32>,
    %c0_214 = arith.constant 0 : index
    %c0_215 = arith.constant 0 : index
    %850 = vector.load %arg7[%c0_214, %c0_215] : memref<1x128xf32, #tpu.memory_space<vmem>>, vector<1x128xf32>
    tpu.vector_store %arg7[%c0_214, %c0_215], %822 {strides = array<i32>} : memref<1x128xf32, #tpu.memory_space<vmem>>, vector<1x128xf32>,
    %851 = arith.extui %786 : vector<1x128xi1> to vector<1x128xi32>
    %852 = arith.sitofp %851 : vector<1x128xi32> to vector<1x128xf32>
    %c0_216 = arith.constant 0 : index
    %c0_217 = arith.constant 0 : index
    %853 = vector.load %arg8[%c0_216, %c0_217] : memref<1x128xf32, #tpu.memory_space<vmem>>, vector<1x128xf32>
    tpu.vector_store %arg8[%c0_216, %c0_217], %852 {strides = array<i32>} : memref<1x128xf32, #tpu.memory_space<vmem>>, vector<1x128xf32>,
    return
  }
  func.func @transform_0(%arg0: i32) -> (i32, i32, i32) {
    %c0_i32 = arith.constant 0 : i32
    %c0_i32_0 = arith.constant 0 : i32
    %c0_i32_1 = arith.constant 0 : i32
    return %c0_i32, %c0_i32_0, %arg0 : i32, i32, i32
  }
  func.func @transform_1(%arg0: i32) -> (i32, i32) {
    %c0_i32 = arith.constant 0 : i32
    %c0_i32_0 = arith.constant 0 : i32
    return %c0_i32, %arg0 : i32, i32
  }
  func.func @transform_2(%arg0: i32) -> (i32, i32) {
    %c0_i32 = arith.constant 0 : i32
    %c0_i32_0 = arith.constant 0 : i32
    return %c0_i32, %arg0 : i32, i32
  }
  func.func @transform_3(%arg0: i32) -> (i32, i32) {
    %c0_i32 = arith.constant 0 : i32
    %c0_i32_0 = arith.constant 0 : i32
    return %c0_i32, %arg0 : i32, i32
  }
  func.func @transform_4(%arg0: i32) -> (i32, i32) {
    %c0_i32 = arith.constant 0 : i32
    %c0_i32_0 = arith.constant 0 : i32
    return %c0_i32, %arg0 : i32, i32
  }
  func.func @transform_5(%arg0: i32) -> (i32, i32) {
    %c0_i32 = arith.constant 0 : i32
    %c0_i32_0 = arith.constant 0 : i32
    return %c0_i32, %arg0 : i32, i32
  }
  func.func @transform_6(%arg0: i32) -> (i32, i32) {
    %c0_i32 = arith.constant 0 : i32
    %c0_i32_0 = arith.constant 0 : i32
    return %c0_i32, %arg0 : i32, i32
  }
  func.func @transform_7(%arg0: i32) -> (i32, i32) {
    %c0_i32 = arith.constant 0 : i32
    %c0_i32_0 = arith.constant 0 : i32
    return %c0_i32, %arg0 : i32, i32
  }
}

</mosaic_0001>

<llo_original>
// kernel: run.1
$region0: #{run.1}
  #allocation0 [shape = 'u32[]', space=smem, size = 0x4, offset = 0x4, fixed_abs, tag = 'smem constant byte address 0x4 - core index']
  #allocation1 [shape = 'u32[72,128]{1,0:T(1,128)}', space=vmem, size = 0x9000, scoped, tag = 'internal scratch']
  %s0 = inlined_call_operand.vmem [shape: f32[10,1,128], index: 0, kind: input, shape index: {}]
  %s1 = inlined_call_operand.vmem [shape: f32[8,128], index: 1, kind: input, shape index: {}]
  %s2 = inlined_call_operand.vmem [shape: f32[8,128], index: 2, kind: input, shape index: {}]
  %s3 = inlined_call_operand.vmem [shape: f32[1,128], index: 3, kind: input, shape index: {}]
  %s4 = inlined_call_operand.vmem [shape: f32[8,128], index: 4, kind: output, shape index: {0}]
  %s5 = inlined_call_operand.vmem [shape: f32[8,128], index: 5, kind: output, shape index: {1}]
  %s6 = inlined_call_operand.vmem [shape: f32[1,128], index: 6, kind: output, shape index: {2}]
  %s7 = inlined_call_operand.vmem [shape: f32[1,128], index: 7, kind: output, shape index: {3}]
  %8 = xla_tuple %s4, %s5, %s6, %s7
  %s9 = sld [smem:[#allocation0]]
  $region50: #{run.1} parent=0
    _
  %s11 = ssub.s32 1, %s9
  %s12 = scalar_select 0, %s11, %s9
  // Predicated region
  $region2: #{run.1} parent=0 // pred_check
    _
  $region3: #{run.1} parent=0 // pred_check_branch
    %14 = sbr.rel (0) target = $region5
  $region4: #{run.1} parent=0 // pred_region
    _
  $region5: #{run.1} parent=0 // pred_fallthru
    _
  // Predicated region
  $region6: #{run.1} parent=0 // pred_check
    _
  $region7: #{run.1} parent=0 // pred_check_branch
    %16 = sbr.rel (0) target = $region9
  $region8: #{run.1} parent=0 // pred_region
    _
  $region9: #{run.1} parent=0 // pred_fallthru
    _
  // Predicated region
  $region10: #{run.1} parent=0 // pred_check
    _
  $region11: #{run.1} parent=0 // pred_check_branch
    %18 = sbr.rel (0) target = $region13
  $region12: #{run.1} parent=0 // pred_region
    _
  $region13: #{run.1} parent=0 // pred_fallthru
    _
  // Predicated region
  $region14: #{run.1} parent=0 // pred_check
    _
  $region15: #{run.1} parent=0 // pred_check_branch
    %20 = sbr.rel (0) target = $region17
  $region16: #{run.1} parent=0 // pred_region
    _
  $region17: #{run.1} parent=0 // pred_fallthru
    _
  %v21 = vlaneseq
  %v22 = vshrl.u32 %v21, 7
  %vm23 = vcmp.eq.s32.totalorder %v22, 0
  %v24 = vld [vmem:[%s1] sm:$0xff]
  %v25 = vld [vmem:[%s2] sm:$0xff]
  %v26 = vld [vmem:[%s3] sm:$0x1]
  %v27 = vsub.f32 %v24, %v25
  %v28 = vadd.f32 %v24, %v25
  %vm29 = vcmp.le.f32.partialorder %v28, 3.0
  %vm30 = vcmp.gt.f32.partialorder %v27, 3.0
  %v31 = vsub.f32 %v28, %v27
  %vm32 = vcmp.eq.f32.partialorder %v31, 0.0
  %v33 = vsel %vm32, 1.0, %v31
  %v34 = vrcp.pop %v33
  %v35 = vsub.f32 3.0, %v27
  %v36 = vmul.f32 %v35, %v34
  %v37 = vsel %vm30, 0.0, %v36
  %v38 = vsel %vm29, 1.0, %v37
  %v39 = vsub.f32 1.0, %v38
  %v40 = vld [vmem:[%s0] sm:$0x1]
  %vm41 = vcmp.lt.f32.partialorder %v40, %v38
  %v42 = vmin.f32 %v28, 3.0
  %v43 = vmax.f32 %v27, 3.0
  %v44 = vadd.f32 %v27, %v42
  %v45 = vmul.f32 %v44, 0.5
  %v46 = vsub.f32 %v42, %v27
  %v47 = vmul.f32 %v46, 0.5
  %v48 = vadd.f32 %v43, %v28
  %v49 = vmul.f32 %v48, 0.5
  %v50 = vsub.f32 %v28, %v43
  %v51 = vmul.f32 %v50, 0.5
  %v52 = vmax.f32 %v38, 1e-38
  %v53 = vlog2.pop %v52
  %v54 = vmul.f32 %v53, 0.6931472
  %v55 = vadd.f32 %v26, %v54
  %v56 = vmax.f32 %v39, 1e-38
  %v57 = vlog2.pop %v56
  %v58 = vmul.f32 %v57, 0.6931472
  %v59 = vadd.f32 %v26, %v58
  %v60 = vperm.slane %v45, 0
  %v61 = vsel %vm23, %v60, %v24
  %v62 = vperm.slane %v47, 0
  %v63 = vsel %vm23, %v62, %v25
  %v64 = vadd.f32 %v61, 1.0
  %v65 = vsel %vm23, %v64, %v24
  %v66 = vsel %vm41, 1, 0
  %v67 = vperm.slane %v66, 0
  %vm68 = vcmp.eq.s32.totalorder %v67, 1
  %v69 = vsel %vm68, %v65, %v24
  %v70 = vsel %vm68, %v63, %v25
  %v71 = vsel %vm41, %v55, %v26
  %v72 = vsub.f32 %v69, %v70
  %v73 = vadd.f32 %v69, %v70
  %vm74 = vcmp.le.f32.partialorder %v73, 3.0
  %vm75 = vcmp.gt.f32.partialorder %v72, 3.0
  %v76 = vsub.f32 %v73, %v72
  %vm77 = vcmp.eq.f32.partialorder %v76, 0.0
  %v78 = vsel %vm77, 1.0, %v76
  %v79 = vrcp.pop %v78
  %v80 = vsub.f32 3.0, %v72
  %v81 = vmul.f32 %v80, %v79
  %v82 = vsel %vm75, 0.0, %v81
  %v83 = vsel %vm74, 1.0, %v82
  %v84 = vsub.f32 1.0, %v83
  %s85 = scalar_lea.vmem %s0, 1
  %v86 = vld [vmem:[%s85] sm:$0x1]
  %vm87 = vcmp.lt.f32.partialorder %v86, %v83
  %vm88 = vmand %vm87, %vm41
  %v89 = vmin.f32 %v73, 3.0
  %v90 = vmax.f32 %v72, 3.0
  %v91 = vadd.f32 %v72, %v89
  %v92 = vmul.f32 %v91, 0.5
  %v93 = vsub.f32 %v89, %v72
  %v94 = vmul.f32 %v93, 0.5
  %v95 = vadd.f32 %v90, %v73
  %v96 = vmul.f32 %v95, 0.5
  %v97 = vsub.f32 %v73, %v90
  %v98 = vmul.f32 %v97, 0.5
  %v99 = vmax.f32 %v83, 1e-38
  %v100 = vlog2.pop %v99
  %v101 = vmul.f32 %v100, 0.6931472
  %v102 = vadd.f32 %v71, %v101
  %v103 = vmax.f32 %v84, 1e-38
  %v104 = vlog2.pop %v103
  %v105 = vmul.f32 %v104, 0.6931472
  %v106 = vadd.f32 %v71, %v105
  %v107 = vsel %vm87, %v92, %v96
  %v108 = vsel %vm41, %v107, %v49
  %v109 = vsel %vm87, %v94, %v98
  %v110 = vsel %vm41, %v109, %v51
  %v111 = vsel %vm87, %v102, %v106
  %v112 = vsel %vm41, %v111, %v59
  %v113 = vperm.slane %v92, 0
  %v114 = vsel %vm23, %v113, %v69
  %v115 = vperm.slane %v94, 0
  %v116 = vsel %vm23, %v115, %v70
  %v117 = vadd.f32 %v114, 1.0
  %v118 = vsel %vm23, %v117, %v69
  %v119 = vsel %vm88, 1, 0
  %v120 = vperm.slane %v119, 0
  %vm121 = vcmp.eq.s32.totalorder %v120, 1
  %v122 = vsel %vm121, %v118, %v69
  %v123 = vsel %vm121, %v116, %v70
  %v124 = vsel %vm88, %v102, %v71
  %v125 = vsub.f32 %v122, %v123
  %v126 = vadd.f32 %v122, %v123
  %vm127 = vcmp.le.f32.partialorder %v126, 3.0
  %vm128 = vcmp.gt.f32.partialorder %v125, 3.0
  %v129 = vsub.f32 %v126, %v125
  %vm130 = vcmp.eq.f32.partialorder %v129, 0.0
  %v131 = vsel %vm130, 1.0, %v129
  %v132 = vrcp.pop %v131
  %v133 = vsub.f32 3.0, %v125
  %v134 = vmul.f32 %v133, %v132
  %v135 = vsel %vm128, 0.0, %v134
  %v136 = vsel %vm127, 1.0, %v135
  %v137 = vsub.f32 1.0, %v136
  %s138 = scalar_lea.vmem %s0, 2
  %v139 = vld [vmem:[%s138] sm:$0x1]
  %vm140 = vcmp.lt.f32.partialorder %v139, %v136
  %vm141 = vmand %vm140, %vm88
  %v142 = vmin.f32 %v126, 3.0
  %v143 = vmax.f32 %v125, 3.0
  %v144 = vadd.f32 %v125, %v142
  %v145 = vmul.f32 %v144, 0.5
  %v146 = vsub.f32 %v142, %v125
  %v147 = vmul.f32 %v146, 0.5
  %v148 = vadd.f32 %v143, %v126
  %v149 = vmul.f32 %v148, 0.5
  %v150 = vsub.f32 %v126, %v143
  %v151 = vmul.f32 %v150, 0.5
  %v152 = vmax.f32 %v136, 1e-38
  %v153 = vlog2.pop %v152
  %v154 = vmul.f32 %v153, 0.6931472
  %v155 = vadd.f32 %v124, %v154
  %v156 = vmax.f32 %v137, 1e-38
  %v157 = vlog2.pop %v156
  %v158 = vmul.f32 %v157, 0.6931472
  %v159 = vadd.f32 %v124, %v158
  %v160 = vsel %vm140, %v145, %v149
  %v161 = vsel %vm88, %v160, %v108
  %v162 = vsel %vm140, %v147, %v151
  %v163 = vsel %vm88, %v162, %v110
  %v164 = vsel %vm140, %v155, %v159
  %v165 = vsel %vm88, %v164, %v112
  %v166 = vperm.slane %v145, 0
  %v167 = vsel %vm23, %v166, %v122
  %v168 = vperm.slane %v147, 0
  %v169 = vsel %vm23, %v168, %v123
  %v170 = vadd.f32 %v167, 1.0
  %v171 = vsel %vm23, %v170, %v122
  %v172 = vsel %vm141, 1, 0
  %v173 = vperm.slane %v172, 0
  %vm174 = vcmp.eq.s32.totalorder %v173, 1
  %v175 = vsel %vm174, %v171, %v122
  %v176 = vsel %vm174, %v169, %v123
  %v177 = vsel %vm141, %v155, %v124
  %v178 = vsub.f32 %v175, %v176
  %v179 = vadd.f32 %v175, %v176
  %vm180 = vcmp.le.f32.partialorder %v179, 3.0
  %vm181 = vcmp.gt.f32.partialorder %v178, 3.0
  %v182 = vsub.f32 %v179, %v178
  %vm183 = vcmp.eq.f32.partialorder %v182, 0.0
  %v184 = vsel %vm183, 1.0, %v182
  %v185 = vrcp.pop %v184
  %v186 = vsub.f32 3.0, %v178
  %v187 = vmul.f32 %v186, %v185
  %v188 = vsel %vm181, 0.0, %v187
  %v189 = vsel %vm180, 1.0, %v188
  %v190 = vsub.f32 1.0, %v189
  %s191 = scalar_lea.vmem %s0, 3
  %v192 = vld [vmem:[%s191] sm:$0x1]
  %vm193 = vcmp.lt.f32.partialorder %v192, %v189
  %vm194 = vmand %vm193, %vm141
  %v195 = vmin.f32 %v179, 3.0
  %v196 = vmax.f32 %v178, 3.0
  %v197 = vadd.f32 %v178, %v195
  %v198 = vmul.f32 %v197, 0.5
  %v199 = vsub.f32 %v195, %v178
  %v200 = vmul.f32 %v199, 0.5
  %v201 = vadd.f32 %v196, %v179
  %v202 = vmul.f32 %v201, 0.5
  %v203 = vsub.f32 %v179, %v196
  %v204 = vmul.f32 %v203, 0.5
  %v205 = vmax.f32 %v189, 1e-38
  %v206 = vlog2.pop %v205
  %v207 = vmul.f32 %v206, 0.6931472
  %v208 = vadd.f32 %v177, %v207
  %v209 = vmax.f32 %v190, 1e-38
  %v210 = vlog2.pop %v209
  %v211 = vmul.f32 %v210, 0.6931472
  %v212 = vadd.f32 %v177, %v211
  %v213 = vsel %vm193, %v198, %v202
  %v214 = vsel %vm141, %v213, %v161
  %v215 = vsel %vm193, %v200, %v204
  %v216 = vsel %vm141, %v215, %v163
  %v217 = vsel %vm193, %v208, %v212
  %v218 = vsel %vm141, %v217, %v165
  %v219 = vperm.slane %v198, 0
  %v220 = vsel %vm23, %v219, %v175
  %v221 = vperm.slane %v200, 0
  %v222 = vsel %vm23, %v221, %v176
  %v223 = vadd.f32 %v220, 1.0
  %v224 = vsel %vm23, %v223, %v175
  %v225 = vsel %vm194, 1, 0
  %v226 = vperm.slane %v225, 0
  %vm227 = vcmp.eq.s32.totalorder %v226, 1
  %v228 = vsel %vm227, %v224, %v175
  %v229 = vsel %vm227, %v222, %v176
  %v230 = vsel %vm194, %v208, %v177
  %v231 = vsub.f32 %v228, %v229
  %v232 = vadd.f32 %v228, %v229
  %vm233 = vcmp.le.f32.partialorder %v232, 3.0
  %vm234 = vcmp.gt.f32.partialorder %v231, 3.0
  %v235 = vsub.f32 %v232, %v231
  %vm236 = vcmp.eq.f32.partialorder %v235, 0.0
  %v237 = vsel %vm236, 1.0, %v235
  %v238 = vrcp.pop %v237
  %v239 = vsub.f32 3.0, %v231
  %v240 = vmul.f32 %v239, %v238
  %v241 = vsel %vm234, 0.0, %v240
  %v242 = vsel %vm233, 1.0, %v241
  %v243 = vsub.f32 1.0, %v242
  %s244 = scalar_lea.vmem %s0, 4
  %v245 = vld [vmem:[%s244] sm:$0x1]
  %vm246 = vcmp.lt.f32.partialorder %v245, %v242
  %vm247 = vmand %vm246, %vm194
  %v248 = vmin.f32 %v232, 3.0
  %v249 = vmax.f32 %v231, 3.0
  %v250 = vadd.f32 %v231, %v248
  %v251 = vmul.f32 %v250, 0.5
  %v252 = vsub.f32 %v248, %v231
  %v253 = vmul.f32 %v252, 0.5
  %v254 = vadd.f32 %v249, %v232
  %v255 = vmul.f32 %v254, 0.5
  %v256 = vsub.f32 %v232, %v249
  %v257 = vmul.f32 %v256, 0.5
  %v258 = vmax.f32 %v242, 1e-38
  %v259 = vlog2.pop %v258
  %v260 = vmul.f32 %v259, 0.6931472
  %v261 = vadd.f32 %v230, %v260
  %v262 = vmax.f32 %v243, 1e-38
  %v263 = vlog2.pop %v262
  %v264 = vmul.f32 %v263, 0.6931472
  %v265 = vadd.f32 %v230, %v264
  %v266 = vsel %vm246, %v251, %v255
  %v267 = vsel %vm194, %v266, %v214
  %v268 = vsel %vm246, %v253, %v257
  %v269 = vsel %vm194, %v268, %v216
  %v270 = vsel %vm246, %v261, %v265
  %v271 = vsel %vm194, %v270, %v218
  %v272 = vperm.slane %v251, 0
  %v273 = vsel %vm23, %v272, %v228
  %v274 = vperm.slane %v253, 0
  %v275 = vsel %vm23, %v274, %v229
  %v276 = vadd.f32 %v273, 1.0
  %v277 = vsel %vm23, %v276, %v228
  %v278 = vsel %vm247, 1, 0
  %v279 = vperm.slane %v278, 0
  %vm280 = vcmp.eq.s32.totalorder %v279, 1
  %v281 = vsel %vm280, %v277, %v228
  %v282 = vsel %vm280, %v275, %v229
  %v283 = vsel %vm247, %v261, %v230
  %v284 = vsub.f32 %v281, %v282
  %v285 = vadd.f32 %v281, %v282
  %vm286 = vcmp.le.f32.partialorder %v285, 3.0
  %vm287 = vcmp.gt.f32.partialorder %v284, 3.0
  %v288 = vsub.f32 %v285, %v284
  %vm289 = vcmp.eq.f32.partialorder %v288, 0.0
  %v290 = vsel %vm289, 1.0, %v288
  %v291 = vrcp.pop %v290
  %v292 = vsub.f32 3.0, %v284
  %v293 = vmul.f32 %v292, %v291
  %v294 = vsel %vm287, 0.0, %v293
  %v295 = vsel %vm286, 1.0, %v294
  %v296 = vsub.f32 1.0, %v295
  %s297 = scalar_lea.vmem %s0, 5
  %v298 = vld [vmem:[%s297] sm:$0x1]
  %vm299 = vcmp.lt.f32.partialorder %v298, %v295
  %vm300 = vmand %vm299, %vm247
  %v301 = vmin.f32 %v285, 3.0
  %v302 = vmax.f32 %v284, 3.0
  %v303 = vadd.f32 %v284, %v301
  %v304 = vmul.f32 %v303, 0.5
  %v305 = vsub.f32 %v301, %v284
  %v306 = vmul.f32 %v305, 0.5
  %v307 = vadd.f32 %v302, %v285
  %v308 = vmul.f32 %v307, 0.5
  %v309 = vsub.f32 %v285, %v302
  %v310 = vmul.f32 %v309, 0.5
  %v311 = vmax.f32 %v295, 1e-38
  %v312 = vlog2.pop %v311
  %v313 = vmul.f32 %v312, 0.6931472
  %v314 = vadd.f32 %v283, %v313
  %v315 = vmax.f32 %v296, 1e-38
  %v316 = vlog2.pop %v315
  %v317 = vmul.f32 %v316, 0.6931472
  %v318 = vadd.f32 %v283, %v317
  %v319 = vsel %vm299, %v304, %v308
  %v320 = vsel %vm247, %v319, %v267
  %v321 = vsel %vm299, %v306, %v310
  %v322 = vsel %vm247, %v321, %v269
  %v323 = vsel %vm299, %v314, %v318
  %v324 = vsel %vm247, %v323, %v271
  %v325 = vperm.slane %v304, 0
  %v326 = vsel %vm23, %v325, %v281
  %v327 = vperm.slane %v306, 0
  %v328 = vsel %vm23, %v327, %v282
  %v329 = vadd.f32 %v326, 1.0
  %v330 = vsel %vm23, %v329, %v281
  %v331 = vsel %vm300, 1, 0
  %v332 = vperm.slane %v331, 0
  %vm333 = vcmp.eq.s32.totalorder %v332, 1
  %v334 = vsel %vm333, %v330, %v281
  %v335 = vsel %vm333, %v328, %v282
  %v336 = vsel %vm300, %v314, %v283
  %v337 = vsub.f32 %v334, %v335
  %v338 = vadd.f32 %v334, %v335
  %vm339 = vcmp.le.f32.partialorder %v338, 3.0
  %vm340 = vcmp.gt.f32.partialorder %v337, 3.0
  %v341 = vsub.f32 %v338, %v337
  %vm342 = vcmp.eq.f32.partialorder %v341, 0.0
  %v343 = vsel %vm342, 1.0, %v341
  %v344 = vrcp.pop %v343
  %v345 = vsub.f32 3.0, %v337
  %v346 = vmul.f32 %v345, %v344
  %v347 = vsel %vm340, 0.0, %v346
  %v348 = vsel %vm339, 1.0, %v347
  %v349 = vsub.f32 1.0, %v348
  %s350 = scalar_lea.vmem %s0, 6
  %v351 = vld [vmem:[%s350] sm:$0x1]
  %vm352 = vcmp.lt.f32.partialorder %v351, %v348
  %vm353 = vmand %vm352, %vm300
  %v354 = vmin.f32 %v338, 3.0
  %v355 = vmax.f32 %v337, 3.0
  %v356 = vadd.f32 %v337, %v354
  %v357 = vmul.f32 %v356, 0.5
  %v358 = vsub.f32 %v354, %v337
  %v359 = vmul.f32 %v358, 0.5
  %v360 = vadd.f32 %v355, %v338
  %v361 = vmul.f32 %v360, 0.5
  %v362 = vsub.f32 %v338, %v355
  %v363 = vmul.f32 %v362, 0.5
  %v364 = vmax.f32 %v348, 1e-38
  %v365 = vlog2.pop %v364
  %v366 = vmul.f32 %v365, 0.6931472
  %v367 = vadd.f32 %v336, %v366
  %v368 = vmax.f32 %v349, 1e-38
  %v369 = vlog2.pop %v368
  %v370 = vmul.f32 %v369, 0.6931472
  %v371 = vadd.f32 %v336, %v370
  %v372 = vsel %vm352, %v357, %v361
  %v373 = vsel %vm300, %v372, %v320
  %v374 = vsel %vm352, %v359, %v363
  %v375 = vsel %vm300, %v374, %v322
  %v376 = vsel %vm352, %v367, %v371
  %v377 = vsel %vm300, %v376, %v324
  %v378 = vperm.slane %v357, 0
  %v379 = vsel %vm23, %v378, %v334
  %v380 = vperm.slane %v359, 0
  %v381 = vsel %vm23, %v380, %v335
  %v382 = vadd.f32 %v379, 1.0
  %v383 = vsel %vm23, %v382, %v334
  %v384 = vsel %vm353, 1, 0
  %v385 = vperm.slane %v384, 0
  %vm386 = vcmp.eq.s32.totalorder %v385, 1
  %v387 = vsel %vm386, %v383, %v334
  %v388 = vsel %vm386, %v381, %v335
  %v389 = vsel %vm353, %v367, %v336
  %v390 = vsub.f32 %v387, %v388
  %v391 = vadd.f32 %v387, %v388
  %vm392 = vcmp.le.f32.partialorder %v391, 3.0
  %vm393 = vcmp.gt.f32.partialorder %v390, 3.0
  %v394 = vsub.f32 %v391, %v390
  %vm395 = vcmp.eq.f32.partialorder %v394, 0.0
  %v396 = vsel %vm395, 1.0, %v394
  %v397 = vrcp.pop %v396
  %v398 = vsub.f32 3.0, %v390
  %v399 = vmul.f32 %v398, %v397
  %v400 = vsel %vm393, 0.0, %v399
  %v401 = vsel %vm392, 1.0, %v400
  %v402 = vsub.f32 1.0, %v401
  %s403 = scalar_lea.vmem %s0, 7
  %v404 = vld [vmem:[%s403] sm:$0x1]
  %vm405 = vcmp.lt.f32.partialorder %v404, %v401
  %vm406 = vmand %vm405, %vm353
  %v407 = vmin.f32 %v391, 3.0
  %v408 = vmax.f32 %v390, 3.0
  %v409 = vadd.f32 %v390, %v407
  %v410 = vmul.f32 %v409, 0.5
  %v411 = vsub.f32 %v407, %v390
  %v412 = vmul.f32 %v411, 0.5
  %v413 = vadd.f32 %v408, %v391
  %v414 = vmul.f32 %v413, 0.5
  %v415 = vsub.f32 %v391, %v408
  %v416 = vmul.f32 %v415, 0.5
  %v417 = vmax.f32 %v401, 1e-38
  %v418 = vlog2.pop %v417
  %v419 = vmul.f32 %v418, 0.6931472
  %v420 = vadd.f32 %v389, %v419
  %v421 = vmax.f32 %v402, 1e-38
  %v422 = vlog2.pop %v421
  %v423 = vmul.f32 %v422, 0.6931472
  %v424 = vadd.f32 %v389, %v423
  %v425 = vsel %vm405, %v410, %v414
  %v426 = vsel %vm353, %v425, %v373
  %v427 = vsel %vm405, %v412, %v416
  %v428 = vsel %vm353, %v427, %v375
  %v429 = vsel %vm405, %v420, %v424
  %v430 = vsel %vm353, %v429, %v377
  %v431 = vperm.slane %v410, 0
  %v432 = vsel %vm23, %v431, %v387
  %v433 = vperm.slane %v412, 0
  %v434 = vsel %vm23, %v433, %v388
  %v435 = vadd.f32 %v432, 1.0
  %v436 = vsel %vm23, %v435, %v387
  %v437 = vsel %vm406, 1, 0
  %v438 = vperm.slane %v437, 0
  %vm439 = vcmp.eq.s32.totalorder %v438, 1
  %v440 = vsel %vm439, %v436, %v387
  %v441 = vsel %vm439, %v434, %v388
  %v442 = vsel %vm406, %v420, %v389
  %v443 = vsub.f32 %v440, %v441
  %v444 = vadd.f32 %v440, %v441
  %vm445 = vcmp.le.f32.partialorder %v444, 3.0
  %vm446 = vcmp.gt.f32.partialorder %v443, 3.0
  %v447 = vsub.f32 %v444, %v443
  %vm448 = vcmp.eq.f32.partialorder %v447, 0.0
  %v449 = vsel %vm448, 1.0, %v447
  %v450 = vrcp.pop %v449
  %v451 = vsub.f32 3.0, %v443
  %v452 = vmul.f32 %v451, %v450
  %v453 = vsel %vm446, 0.0, %v452
  %v454 = vsel %vm445, 1.0, %v453
  %v455 = vsub.f32 1.0, %v454
  %s456 = scalar_lea.vmem %s0, 8
  %v457 = vld [vmem:[%s456] sm:$0x1]
  %vm458 = vcmp.lt.f32.partialorder %v457, %v454
  %vm459 = vmand %vm458, %vm406
  %v460 = vmin.f32 %v444, 3.0
  %v461 = vmax.f32 %v443, 3.0
  %v462 = vadd.f32 %v443, %v460
  %v463 = vmul.f32 %v462, 0.5
  %v464 = vsub.f32 %v460, %v443
  %v465 = vmul.f32 %v464, 0.5
  %v466 = vadd.f32 %v461, %v444
  %v467 = vmul.f32 %v466, 0.5
  %v468 = vsub.f32 %v444, %v461
  %v469 = vmul.f32 %v468, 0.5
  %v470 = vmax.f32 %v454, 1e-38
  %v471 = vlog2.pop %v470
  %v472 = vmul.f32 %v471, 0.6931472
  %v473 = vadd.f32 %v442, %v472
  %v474 = vmax.f32 %v455, 1e-38
  %v475 = vlog2.pop %v474
  %v476 = vmul.f32 %v475, 0.6931472
  %v477 = vadd.f32 %v442, %v476
  %v478 = vsel %vm458, %v463, %v467
  %v479 = vsel %vm406, %v478, %v426
  %v480 = vsel %vm458, %v465, %v469
  %v481 = vsel %vm406, %v480, %v428
  %v482 = vsel %vm458, %v473, %v477
  %v483 = vsel %vm406, %v482, %v430
  %v484 = vperm.slane %v463, 0
  %v485 = vsel %vm23, %v484, %v440
  %v486 = vperm.slane %v465, 0
  %v487 = vsel %vm23, %v486, %v441
  %v488 = vadd.f32 %v485, 1.0
  %v489 = vsel %vm23, %v488, %v440
  %v490 = vsel %vm459, 1, 0
  %v491 = vperm.slane %v490, 0
  %vm492 = vcmp.eq.s32.totalorder %v491, 1
  %v493 = vsel %vm492, %v489, %v440
  %v494 = vsel %vm492, %v487, %v441
  %v495 = vsel %vm459, %v473, %v442
  %v496 = vsub.f32 %v493, %v494
  %v497 = vadd.f32 %v493, %v494
  %vm498 = vcmp.le.f32.partialorder %v497, 3.0
  %vm499 = vcmp.gt.f32.partialorder %v496, 3.0
  %v500 = vsub.f32 %v497, %v496
  %vm501 = vcmp.eq.f32.partialorder %v500, 0.0
  %v502 = vsel %vm501, 1.0, %v500
  %v503 = vrcp.pop %v502
  %v504 = vsub.f32 3.0, %v496
  %v505 = vmul.f32 %v504, %v503
  %v506 = vsel %vm499, 0.0, %v505
  %v507 = vsel %vm498, 1.0, %v506
  %v508 = vsub.f32 1.0, %v507
  %s509 = scalar_lea.vmem %s0, 9
  %v510 = vld [vmem:[%s509] sm:$0x1]
  %vm511 = vcmp.lt.f32.partialorder %v510, %v507
  %vm512 = vmand %vm511, %vm459
  %v513 = vmin.f32 %v497, 3.0
  %v514 = vmax.f32 %v496, 3.0
  %v515 = vadd.f32 %v496, %v513
  %v516 = vmul.f32 %v515, 0.5
  %v517 = vsub.f32 %v513, %v496
  %v518 = vmul.f32 %v517, 0.5
  %v519 = vadd.f32 %v514, %v497
  %v520 = vmul.f32 %v519, 0.5
  %v521 = vsub.f32 %v497, %v514
  %v522 = vmul.f32 %v521, 0.5
  %v523 = vmax.f32 %v507, 1e-38
  %v524 = vlog2.pop %v523
  %v525 = vmul.f32 %v524, 0.6931472
  %v526 = vadd.f32 %v495, %v525
  %v527 = vmax.f32 %v508, 1e-38
  %v528 = vlog2.pop %v527
  %v529 = vmul.f32 %v528, 0.6931472
  %v530 = vadd.f32 %v495, %v529
  %v531 = vsel %vm511, %v516, %v520
  %v532 = vsel %vm459, %v531, %v479
  %v533 = vsel %vm511, %v518, %v522
  %v534 = vsel %vm459, %v533, %v481
  %v535 = vsel %vm511, %v526, %v530
  %v536 = vsel %vm459, %v535, %v483
  %v538 = vperm.slane %v532, 0
  %v540 = vsel %vm23, %v538, %v493
  %541 = vst [vmem:[%s4] sm:$0xff] %v540
  %v543 = vperm.slane %v534, 0
  %v545 = vsel %vm23, %v543, %v494
  %546 = vst [vmem:[%s5] sm:$0xff] %v545
  %547 = vst [vmem:[%s6] sm:$0x1] %v536
  %v548 = vsel %vm512, 1, 0
  %v549 = vcvt.s32.f32 %v548
  %550 = vst [vmem:[%s7] sm:$0x1] %v549
  // Predicated region
  $region18: #{run.1} parent=0 // pred_check
    _
  $region19: #{run.1} parent=0 // pred_check_branch
    %552 = sbr.rel (0) target = $region21
  $region20: #{run.1} parent=0 // pred_region
    _
  $region21: #{run.1} parent=0 // pred_fallthru
    _
  // Predicated region
  $region22: #{run.1} parent=0 // pred_check
    _
  $region23: #{run.1} parent=0 // pred_check_branch
    %554 = sbr.rel (0) target = $region25
  $region24: #{run.1} parent=0 // pred_region
    _
  $region25: #{run.1} parent=0 // pred_fallthru
    _
  // Predicated region
  $region26: #{run.1} parent=0 // pred_check
    _
  $region27: #{run.1} parent=0 // pred_check_branch
    %556 = sbr.rel (0) target = $region29
  $region28: #{run.1} parent=0 // pred_region
    _
  $region29: #{run.1} parent=0 // pred_fallthru
    _
  // Predicated region
  $region30: #{run.1} parent=0 // pred_check
    _
  $region31: #{run.1} parent=0 // pred_check_branch
    %558 = sbr.rel (0) target = $region33
  $region32: #{run.1} parent=0 // pred_region
    _
  $region33: #{run.1} parent=0 // pred_fallthru
    _
  // Predicated region
  $region34: #{run.1} parent=0 // pred_check
    _
  $region35: #{run.1} parent=0 // pred_check_branch
    %560 = sbr.rel (0) target = $region37
  $region36: #{run.1} parent=0 // pred_region
    _
  $region37: #{run.1} parent=0 // pred_fallthru
    _
  // Predicated region
  $region38: #{run.1} parent=0 // pred_check
    _
  $region39: #{run.1} parent=0 // pred_check_branch
    %562 = sbr.rel (0) target = $region41
  $region40: #{run.1} parent=0 // pred_region
    _
  $region41: #{run.1} parent=0 // pred_fallthru
    _
  // Predicated region
  $region42: #{run.1} parent=0 // pred_check
    _
  $region43: #{run.1} parent=0 // pred_check_branch
    %564 = sbr.rel (0) target = $region45
  $region44: #{run.1} parent=0 // pred_region
    _
  $region45: #{run.1} parent=0 // pred_fallthru
    _
  // Predicated region
  $region46: #{run.1} parent=0 // pred_check
    _
  $region47: #{run.1} parent=0 // pred_check_branch
    %566 = sbr.rel (0) target = $region49
  $region48: #{run.1} parent=0 // pred_region
    _
  $region49: #{run.1} parent=0 // pred_fallthru
    _

</llo_original>
